<compile_context>
chip_gen: v6e
topology: v6e:2x2x1
jax: 0.10.0
libtpu: 0.0.40
codegen_flags: <defaults>
</compile_context>

<pallas_src>
import jax
import jax.numpy as jnp
from jax.experimental import pallas as pl
from jax.experimental.pallas import tpu as pltpu

_KS = (3, 5, 10)          # small / middle / large depthwise kernel sizes
_W_OFF = (0, 3, 8)        # tap offsets inside the packed (2, C, 21) weight array
_B_OFF = 18               # bias column offset: column 18 + branch index
_CHUNK = 512              # in-kernel time-chunk width (final-output positions)


# --------------------------------------------------------------------------- #
# Kernel 1: 3-branch depthwise conv + ReLU + pool + 3->1 linear ("squeeze")
# --------------------------------------------------------------------------- #
def _squeeze_kernel(cat_ref, x_ref, w_ref, sq_ref):
    # cat_ref : SMEM f32[4]      -- feature_concate_fc [w_small, w_mid, w_large, b]
    # x_ref   : VMEM (Ct, L)     -- one (batch, C-tile) slab, full time axis
    # w_ref   : VMEM (2, Ct, 21) -- packed f32 depthwise weights (+ bias cols 18..20)
    # sq_ref  : VMEM (Ct, 1) f32 -- squeeze output for this (batch, C-tile)
    ct, xlen = x_ref.shape
    w_all = w_ref[...]                                      # tiny; loaded once

    def conv2_sum(xs, k, n_out, w0, w1, b0, b1):
        # xs: (Ct, n_out + 2*(k-1)) f32 window.  Returns (Ct, 1) = sum over the
        # n_out valid outputs of ReLU(conv_k(ReLU(conv_k(xs)))) (valid convs,
        # exactly matching PyTorch padding=0), keeping all temporaries at
        # chunk width (vreg / small-VMEM resident).
        n1 = n_out + k - 1
        acc = jnp.zeros((ct, n1), jnp.float32)
        for j in range(k):                                  # unrolled taps, k <= 10
            acc = acc + w0[:, j:j + 1] * xs[:, j:j + n1]
        h1 = jnp.maximum(acc + b0, 0.0)                     # (Ct, n1)
        acc = jnp.zeros((ct, n_out), jnp.float32)
        for j in range(k):
            acc = acc + w1[:, j:j + 1] * h1[:, j:j + n_out]
        h2 = jnp.maximum(acc + b1, 0.0)                     # (Ct, n_out)
        return jnp.sum(h2, axis=-1, keepdims=True)          # (Ct, 1)

    def branch(idx):
        k = _KS[idx]
        off = _W_OFF[idx]
        w0 = w_all[0, :, off:off + k]                       # (Ct, k) layer-1 taps
        w1 = w_all[1, :, off:off + k]                       # (Ct, k) layer-2 taps
        b0 = w_all[0, :, _B_OFF + idx:_B_OFF + idx + 1]     # (Ct, 1)
        b1 = w_all[1, :, _B_OFF + idx:_B_OFF + idx + 1]     # (Ct, 1)
        halo = 2 * (k - 1)
        lf = xlen - halo                                    # valid length after 2 convs
        total = jnp.zeros((ct, 1), jnp.float32)
        # Chunked walk over the time axis: intermediates stay O(Ct * _CHUNK)
        # regardless of L and the pool sum lives in a (Ct, 1) accumulator.
        # Chunk boundaries are static Python ints, so every slice below is a
        # static window of the VMEM block (no dynamic-start lane loads).
        s = 0
        while s < lf:
            n_out = min(_CHUNK, lf - s)
            xs = x_ref[:, s:s + n_out + halo].astype(jnp.float32)
            total = total + conv2_sum(xs, k, n_out, w0, w1, b0, b1)
            s += n_out
        return total * (1.0 / lf)                           # AdaptiveAvgPool1d(1)

    p_s = branch(0)
    p_m = branch(1)
    p_l = branch(2)
    # feature_concate_fc: Linear(3, 1) across the three pooled branch features.
    sq_ref[...] = (cat_ref[0] * p_s + cat_ref[1] * p_m
                   + cat_ref[2] * p_l + cat_ref[3])


# --------------------------------------------------------------------------- #
# Kernel 2: out = x * gate (broadcast over L); f32 multiply, cast on store
# --------------------------------------------------------------------------- #
def _scale_kernel(x_ref, g_ref, o_ref):
    # x_ref/o_ref: (Ct, Lt) native dtype; g_ref: (Ct, 1) f32 gate.
    o_ref[...] = (x_ref[...].astype(jnp.float32) * g_ref[...]).astype(o_ref.dtype)


# --------------------------------------------------------------------------- #
# Wrapper
# --------------------------------------------------------------------------- #
def _tile(dim, cap, align):
    """Largest multiple of `align` that is <= min(dim, cap); the full dim when
    dim < align (a full dim is always a legal TPU block)."""
    if dim < align:
        return dim
    return (min(dim, cap) // align) * align


def channel_deep_time_sense_se(x, params):
    B, C, L = x.shape
    f32 = jnp.float32
    itemsize = jnp.dtype(x.dtype).itemsize
    assert L >= 2 * max(_KS) - 1, "time axis too short for the k=10 branch"

    # Pack the six depthwise conv weight/bias arrays into ONE small array:
    # (2 layers, C channels, 3+5+10 tap columns + 3 bias columns) = (2, C, 21).
    w_all = jnp.concatenate(
        [params["w_small"].astype(f32),
         params["w_mid"].astype(f32),
         params["w_large"].astype(f32),
         params["b_small"].astype(f32)[..., None],
         params["b_mid"].astype(f32)[..., None],
         params["b_large"].astype(f32)[..., None]], axis=-1)
    cat4 = jnp.concatenate(
        [params["cat_w"].reshape(3), params["cat_b"].reshape(1)]).astype(f32)

    # Tile sizes.  The squeeze kernel holds the full time axis per block, so
    # its C tile stays small (bounded VMEM on v5e 16 MiB / v7x 64 MiB); the
    # scale kernel is a pure stream, so use big lane-dense tiles.  cdiv grids
    # mean awkward C/L never fall back to unbounded full-dim blocks.
    c_t_sq = _tile(C, cap=32, align=8)
    c_t_sc = _tile(C, cap=256, align=8)
    l_t_sc = _tile(L, cap=2048, align=128)
    # TODO(synk): for very long L (input block 2*c_t_sq*L*itemsize > VMEM) tile
    # L at the grid level with halo'd blocks and a reduction axis.

    # ---- 1) squeeze: multi-scale depthwise convs + pool + 3->1 linear -------
    squeeze = pl.pallas_call(
        _squeeze_kernel,
        out_shape=jax.ShapeDtypeStruct((B, C, 1), f32),
        grid=(pl.cdiv(C, c_t_sq), B),        # B innermost: weight block re-used
        in_specs=[
            pl.BlockSpec(memory_space=pltpu.MemorySpace.SMEM),             # cat4
            pl.BlockSpec((pl.Squeezed(), c_t_sq, L), lambda ci, b: (b, ci, 0)),
            pl.BlockSpec((2, c_t_sq, 21), lambda ci, b: (0, ci, 0)),
        ],
        out_specs=pl.BlockSpec((pl.Squeezed(), c_t_sq, 1),
                               lambda ci, b: (b, ci, 0)),
        compiler_params=pltpu.CompilerParams(
            dimension_semantics=("parallel", "parallel"),
            vmem_limit_bytes=32 * 1024 * 1024),
        cost_estimate=pl.CostEstimate(
            flops=int(4 * B * C * L * sum(_KS)),
            transcendentals=0,
            bytes_accessed=int(B * C * L * itemsize + B * C * 4
                               + w_all.size * 4)),
    )(cat4, x, w_all)

    # ---- 2) excitation MLP (tiny): plain JAX / MXU per performance review ---
    sq = squeeze.reshape(B, C)
    h = jax.nn.relu(sq @ params["fc1_w"].astype(f32).T
                    + params["fc1_b"].astype(f32))
    gate = jax.nn.sigmoid(h @ params["fc2_w"].astype(f32).T
                          + params["fc2_b"].astype(f32))               # (B, C) f32

    # ---- 3) scale: out = x * gate (streaming, tiled, lane-dense) ------------
    out = pl.pallas_call(
        _scale_kernel,
        out_shape=jax.ShapeDtypeStruct((B, C, L), x.dtype),
        grid=(B, pl.cdiv(C, c_t_sc), pl.cdiv(L, l_t_sc)),
        in_specs=[
            pl.BlockSpec((pl.Squeezed(), c_t_sc, l_t_sc),
                         lambda b, ci, li: (b, ci, li)),
            pl.BlockSpec((pl.Squeezed(), c_t_sc, 1),
                         lambda b, ci, li: (b, ci, 0)),
        ],
        out_specs=pl.BlockSpec((pl.Squeezed(), c_t_sc, l_t_sc),
                               lambda b, ci, li: (b, ci, li)),
        compiler_params=pltpu.CompilerParams(
            dimension_semantics=("parallel", "parallel", "parallel")),
        cost_estimate=pl.CostEstimate(
            flops=int(B * C * L),
            transcendentals=0,
            bytes_accessed=int(2 * B * C * L * itemsize + B * C * 4)),
    )(x, gate.reshape(B, C, 1))
    return out


# --------------------------------------------------------------------------- #
# Pure-JAX reference mirroring the PyTorch forward
# --------------------------------------------------------------------------- #
def reference(x, params):
    xf = x.astype(jnp.float32)

    def branch(w, b):
        k = w.shape[-1]
        h = xf
        for layer in range(2):
            lout = h.shape[-1] - k + 1
            acc = jnp.zeros(h.shape[:-1] + (lout,), jnp.float32)
            for j in range(k):
                acc = acc + w[layer][None, :, j:j + 1] * h[:, :, j:j + lout]
            h = jax.nn.relu(acc + b[layer][None, :, None])
        return jnp.mean(h, axis=-1)                            # (B, C)

    p_s = branch(params["w_small"], params["b_small"])
    p_m = branch(params["w_mid"], params["b_mid"])
    p_l = branch(params["w_large"], params["b_large"])
    cw, cb = params["cat_w"], params["cat_b"][0]
    sq = cw[0] * p_s + cw[1] * p_m + cw[2] * p_l + cb           # (B, C)
    h = jax.nn.relu(sq @ params["fc1_w"].T + params["fc1_b"])
    g = jax.nn.sigmoid(h @ params["fc2_w"].T + params["fc2_b"])
    return (x.astype(jnp.float32) * g[:, :, None]).astype(x.dtype)


if __name__ == "__main__":
    key = jax.random.PRNGKey(0)
    # L = 1024 exercises both a full 512-wide chunk and a partial tail chunk
    # inside the squeeze kernel while keeping the problem tiny.
    B, C, L = 2, 8, 1024
    r = 2
    Cr = C // r
    ks = _KS
    keys = jax.random.split(key, 13)

    def nrm(k, shape, scale=0.5):
        return jax.random.normal(k, shape, dtype=jnp.float32) * scale

    params = {
        "w_small": nrm(keys[0], (2, C, ks[0])),
        "b_small": nrm(keys[1], (2, C)),
        "w_mid":   nrm(keys[2], (2, C, ks[1])),
        "b_mid":   nrm(keys[3], (2, C)),
        "w_large": nrm(keys[4], (2, C, ks[2])),
        "b_large": nrm(keys[5], (2, C)),
        "cat_w":   nrm(keys[6], (3,)),
        "cat_b":   nrm(keys[7], (1,)),
        "fc1_w":   nrm(keys[8], (Cr, C)),
        "fc1_b":   nrm(keys[9], (Cr,)),
        "fc2_w":   nrm(keys[10], (C, Cr)),
        "fc2_b":   nrm(keys[11], (C,)),
    }
    x = jax.random.normal(keys[12], (B, C, L), dtype=jnp.float32)

    out = jax.block_until_ready(channel_deep_time_sense_se(x, params))
    ref = reference(x, params)

    assert out.shape == x.shape and out.dtype == x.dtype
    assert jnp.allclose(out, ref, atol=1e-4, rtol=1e-4), \
        float(jnp.max(jnp.abs(out - ref)))
    print("KERNEL_OK")
</pallas_src>

<mosaic_0001>
module attributes {stable_mosaic.version = 11 : i64} {
  func.func @_squeeze_kernel(%arg0: i32, %arg1: i32, %arg2: memref<4xf32, #tpu.memory_space<smem>>, %arg3: memref<1x8x1024xf32, #tpu.memory_space<vmem>>, %arg4: memref<2x8x21xf32, #tpu.memory_space<vmem>>, %arg5: memref<1x8x1xf32, #tpu.memory_space<vmem>>) attributes {dimension_semantics = [#tpu.dimension_semantics<parallel>, #tpu.dimension_semantics<parallel>], iteration_bounds = array<i64: 1, 2>, scalar_prefetch = 0 : i64, scratch_operands = 0 : i64, tpu.core_type = #tpu.core_type<tc>, window_params = [{transform_indices = @transform_0, window_bounds = array<i64: 4>}, {transform_indices = @transform_1, window_bounds = array<i64: 1, 8, 1024>}, {transform_indices = @transform_2, window_bounds = array<i64: 2, 8, 21>}, {transform_indices = @transform_3, window_bounds = array<i64: 1, 8, 1>}]} {
    %c0 = arith.constant 0 : index
    %c0_0 = arith.constant 0 : index
    %c0_1 = arith.constant 0 : index
    %0 = vector.load %arg4[%c0, %c0_0, %c0_1] : memref<2x8x21xf32, #tpu.memory_space<vmem>>, vector<2x8x21xf32>
    %1 = vector.extract_strided_slice %0 {offsets = [0, 0, 0], sizes = [1, 8, 3], strides = [1, 1, 1]} : vector<2x8x21xf32> to vector<1x8x3xf32>
    %2 = vector.shape_cast %1 : vector<1x8x3xf32> to vector<8x3xf32>
    %3 = vector.extract_strided_slice %0 {offsets = [1, 0, 0], sizes = [1, 8, 3], strides = [1, 1, 1]} : vector<2x8x21xf32> to vector<1x8x3xf32>
    %4 = vector.shape_cast %3 : vector<1x8x3xf32> to vector<8x3xf32>
    %5 = vector.extract_strided_slice %0 {offsets = [0, 0, 18], sizes = [1, 8, 1], strides = [1, 1, 1]} : vector<2x8x21xf32> to vector<1x8x1xf32>
    %6 = vector.shape_cast %5 : vector<1x8x1xf32> to vector<8x1xf32>
    %7 = vector.extract_strided_slice %0 {offsets = [1, 0, 18], sizes = [1, 8, 1], strides = [1, 1, 1]} : vector<2x8x21xf32> to vector<1x8x1xf32>
    %8 = vector.shape_cast %7 : vector<1x8x1xf32> to vector<8x1xf32>
    %cst = arith.constant 0.000000e+00 : f32
    %9 = vector.broadcast %cst : f32 to vector<8x1xf32>
    %c0_2 = arith.constant 0 : index
    %c0_3 = arith.constant 0 : index
    %c0_4 = arith.constant 0 : index
    %10 = vector.load %arg3[%c0_2, %c0_3, %c0_4] : memref<1x8x1024xf32, #tpu.memory_space<vmem>>, vector<1x8x516xf32>
    %11 = vector.shape_cast %10 : vector<1x8x516xf32> to vector<8x516xf32>
    %cst_5 = arith.constant 0.000000e+00 : f32
    %12 = vector.broadcast %cst_5 : f32 to vector<8x514xf32>
    %13 = vector.extract_strided_slice %2 {offsets = [0, 0], sizes = [8, 1], strides = [1, 1]} : vector<8x3xf32> to vector<8x1xf32>
    %14 = vector.extract_strided_slice %11 {offsets = [0, 0], sizes = [8, 514], strides = [1, 1]} : vector<8x516xf32> to vector<8x514xf32>
    %15 = vector.broadcast %13 : vector<8x1xf32> to vector<8x514xf32>
    %16 = arith.mulf %15, %14 : vector<8x514xf32>
    %17 = arith.addf %12, %16 : vector<8x514xf32>
    %18 = vector.extract_strided_slice %2 {offsets = [0, 1], sizes = [8, 1], strides = [1, 1]} : vector<8x3xf32> to vector<8x1xf32>
    %19 = vector.extract_strided_slice %11 {offsets = [0, 1], sizes = [8, 514], strides = [1, 1]} : vector<8x516xf32> to vector<8x514xf32>
    %20 = vector.broadcast %18 : vector<8x1xf32> to vector<8x514xf32>
    %21 = arith.mulf %20, %19 : vector<8x514xf32>
    %22 = arith.addf %17, %21 : vector<8x514xf32>
    %23 = vector.extract_strided_slice %2 {offsets = [0, 2], sizes = [8, 1], strides = [1, 1]} : vector<8x3xf32> to vector<8x1xf32>
    %24 = vector.extract_strided_slice %11 {offsets = [0, 2], sizes = [8, 514], strides = [1, 1]} : vector<8x516xf32> to vector<8x514xf32>
    %25 = vector.broadcast %23 : vector<8x1xf32> to vector<8x514xf32>
    %26 = arith.mulf %25, %24 : vector<8x514xf32>
    %27 = arith.addf %22, %26 : vector<8x514xf32>
    %28 = vector.broadcast %6 : vector<8x1xf32> to vector<8x514xf32>
    %29 = arith.addf %27, %28 : vector<8x514xf32>
    %cst_6 = arith.constant 0.000000e+00 : f32
    %30 = vector.broadcast %cst_6 : f32 to vector<8x514xf32>
    %31 = arith.maximumf %29, %30 : vector<8x514xf32>
    %cst_7 = arith.constant 0.000000e+00 : f32
    %32 = vector.broadcast %cst_7 : f32 to vector<8x512xf32>
    %33 = vector.extract_strided_slice %4 {offsets = [0, 0], sizes = [8, 1], strides = [1, 1]} : vector<8x3xf32> to vector<8x1xf32>
    %34 = vector.extract_strided_slice %31 {offsets = [0, 0], sizes = [8, 512], strides = [1, 1]} : vector<8x514xf32> to vector<8x512xf32>
    %35 = vector.broadcast %33 : vector<8x1xf32> to vector<8x512xf32>
    %36 = arith.mulf %35, %34 : vector<8x512xf32>
    %37 = arith.addf %32, %36 : vector<8x512xf32>
    %38 = vector.extract_strided_slice %4 {offsets = [0, 1], sizes = [8, 1], strides = [1, 1]} : vector<8x3xf32> to vector<8x1xf32>
    %39 = vector.extract_strided_slice %31 {offsets = [0, 1], sizes = [8, 512], strides = [1, 1]} : vector<8x514xf32> to vector<8x512xf32>
    %40 = vector.broadcast %38 : vector<8x1xf32> to vector<8x512xf32>
    %41 = arith.mulf %40, %39 : vector<8x512xf32>
    %42 = arith.addf %37, %41 : vector<8x512xf32>
    %43 = vector.extract_strided_slice %4 {offsets = [0, 2], sizes = [8, 1], strides = [1, 1]} : vector<8x3xf32> to vector<8x1xf32>
    %44 = vector.extract_strided_slice %31 {offsets = [0, 2], sizes = [8, 512], strides = [1, 1]} : vector<8x514xf32> to vector<8x512xf32>
    %45 = vector.broadcast %43 : vector<8x1xf32> to vector<8x512xf32>
    %46 = arith.mulf %45, %44 : vector<8x512xf32>
    %47 = arith.addf %42, %46 : vector<8x512xf32>
    %48 = vector.broadcast %8 : vector<8x1xf32> to vector<8x512xf32>
    %49 = arith.addf %47, %48 : vector<8x512xf32>
    %cst_8 = arith.constant 0.000000e+00 : f32
    %50 = vector.broadcast %cst_8 : f32 to vector<8x512xf32>
    %51 = arith.maximumf %49, %50 : vector<8x512xf32>
    %cst_9 = arith.constant dense<0.000000e+00> : vector<8xf32>
    %52 = vector.multi_reduction <add>, %51, %cst_9 [1] : vector<8x512xf32> to vector<8xf32>
    %53 = vector.shape_cast %52 : vector<8xf32> to vector<8x1xf32>
    %54 = arith.addf %9, %53 : vector<8x1xf32>
    %c0_10 = arith.constant 0 : index
    %c0_11 = arith.constant 0 : index
    %c512 = arith.constant 512 : index
    %55 = vector.load %arg3[%c0_10, %c0_11, %c512] : memref<1x8x1024xf32, #tpu.memory_space<vmem>>, vector<1x8x512xf32>
    %56 = vector.shape_cast %55 : vector<1x8x512xf32> to vector<8x512xf32>
    %cst_12 = arith.constant 0.000000e+00 : f32
    %57 = vector.broadcast %cst_12 : f32 to vector<8x510xf32>
    %58 = vector.extract_strided_slice %2 {offsets = [0, 0], sizes = [8, 1], strides = [1, 1]} : vector<8x3xf32> to vector<8x1xf32>
    %59 = vector.extract_strided_slice %56 {offsets = [0, 0], sizes = [8, 510], strides = [1, 1]} : vector<8x512xf32> to vector<8x510xf32>
    %60 = vector.broadcast %58 : vector<8x1xf32> to vector<8x510xf32>
    %61 = arith.mulf %60, %59 : vector<8x510xf32>
    %62 = arith.addf %57, %61 : vector<8x510xf32>
    %63 = vector.extract_strided_slice %2 {offsets = [0, 1], sizes = [8, 1], strides = [1, 1]} : vector<8x3xf32> to vector<8x1xf32>
    %64 = vector.extract_strided_slice %56 {offsets = [0, 1], sizes = [8, 510], strides = [1, 1]} : vector<8x512xf32> to vector<8x510xf32>
    %65 = vector.broadcast %63 : vector<8x1xf32> to vector<8x510xf32>
    %66 = arith.mulf %65, %64 : vector<8x510xf32>
    %67 = arith.addf %62, %66 : vector<8x510xf32>
    %68 = vector.extract_strided_slice %2 {offsets = [0, 2], sizes = [8, 1], strides = [1, 1]} : vector<8x3xf32> to vector<8x1xf32>
    %69 = vector.extract_strided_slice %56 {offsets = [0, 2], sizes = [8, 510], strides = [1, 1]} : vector<8x512xf32> to vector<8x510xf32>
    %70 = vector.broadcast %68 : vector<8x1xf32> to vector<8x510xf32>
    %71 = arith.mulf %70, %69 : vector<8x510xf32>
    %72 = arith.addf %67, %71 : vector<8x510xf32>
    %73 = vector.broadcast %6 : vector<8x1xf32> to vector<8x510xf32>
    %74 = arith.addf %72, %73 : vector<8x510xf32>
    %cst_13 = arith.constant 0.000000e+00 : f32
    %75 = vector.broadcast %cst_13 : f32 to vector<8x510xf32>
    %76 = arith.maximumf %74, %75 : vector<8x510xf32>
    %cst_14 = arith.constant 0.000000e+00 : f32
    %77 = vector.broadcast %cst_14 : f32 to vector<8x508xf32>
    %78 = vector.extract_strided_slice %4 {offsets = [0, 0], sizes = [8, 1], strides = [1, 1]} : vector<8x3xf32> to vector<8x1xf32>
    %79 = vector.extract_strided_slice %76 {offsets = [0, 0], sizes = [8, 508], strides = [1, 1]} : vector<8x510xf32> to vector<8x508xf32>
    %80 = vector.broadcast %78 : vector<8x1xf32> to vector<8x508xf32>
    %81 = arith.mulf %80, %79 : vector<8x508xf32>
    %82 = arith.addf %77, %81 : vector<8x508xf32>
    %83 = vector.extract_strided_slice %4 {offsets = [0, 1], sizes = [8, 1], strides = [1, 1]} : vector<8x3xf32> to vector<8x1xf32>
    %84 = vector.extract_strided_slice %76 {offsets = [0, 1], sizes = [8, 508], strides = [1, 1]} : vector<8x510xf32> to vector<8x508xf32>
    %85 = vector.broadcast %83 : vector<8x1xf32> to vector<8x508xf32>
    %86 = arith.mulf %85, %84 : vector<8x508xf32>
    %87 = arith.addf %82, %86 : vector<8x508xf32>
    %88 = vector.extract_strided_slice %4 {offsets = [0, 2], sizes = [8, 1], strides = [1, 1]} : vector<8x3xf32> to vector<8x1xf32>
    %89 = vector.extract_strided_slice %76 {offsets = [0, 2], sizes = [8, 508], strides = [1, 1]} : vector<8x510xf32> to vector<8x508xf32>
    %90 = vector.broadcast %88 : vector<8x1xf32> to vector<8x508xf32>
    %91 = arith.mulf %90, %89 : vector<8x508xf32>
    %92 = arith.addf %87, %91 : vector<8x508xf32>
    %93 = vector.broadcast %8 : vector<8x1xf32> to vector<8x508xf32>
    %94 = arith.addf %92, %93 : vector<8x508xf32>
    %cst_15 = arith.constant 0.000000e+00 : f32
    %95 = vector.broadcast %cst_15 : f32 to vector<8x508xf32>
    %96 = arith.maximumf %94, %95 : vector<8x508xf32>
    %cst_16 = arith.constant dense<0.000000e+00> : vector<8xf32>
    %97 = vector.multi_reduction <add>, %96, %cst_16 [1] : vector<8x508xf32> to vector<8xf32>
    %98 = vector.shape_cast %97 : vector<8xf32> to vector<8x1xf32>
    %99 = arith.addf %54, %98 : vector<8x1xf32>
    %cst_17 = arith.constant 9.80392214E-4 : f32
    %100 = vector.broadcast %cst_17 : f32 to vector<8x1xf32>
    %101 = arith.mulf %99, %100 : vector<8x1xf32>
    %102 = vector.extract_strided_slice %0 {offsets = [0, 0, 3], sizes = [1, 8, 5], strides = [1, 1, 1]} : vector<2x8x21xf32> to vector<1x8x5xf32>
    %103 = vector.shape_cast %102 : vector<1x8x5xf32> to vector<8x5xf32>
    %104 = vector.extract_strided_slice %0 {offsets = [1, 0, 3], sizes = [1, 8, 5], strides = [1, 1, 1]} : vector<2x8x21xf32> to vector<1x8x5xf32>
    %105 = vector.shape_cast %104 : vector<1x8x5xf32> to vector<8x5xf32>
    %106 = vector.extract_strided_slice %0 {offsets = [0, 0, 19], sizes = [1, 8, 1], strides = [1, 1, 1]} : vector<2x8x21xf32> to vector<1x8x1xf32>
    %107 = vector.shape_cast %106 : vector<1x8x1xf32> to vector<8x1xf32>
    %108 = vector.extract_strided_slice %0 {offsets = [1, 0, 19], sizes = [1, 8, 1], strides = [1, 1, 1]} : vector<2x8x21xf32> to vector<1x8x1xf32>
    %109 = vector.shape_cast %108 : vector<1x8x1xf32> to vector<8x1xf32>
    %cst_18 = arith.constant 0.000000e+00 : f32
    %110 = vector.broadcast %cst_18 : f32 to vector<8x1xf32>
    %c0_19 = arith.constant 0 : index
    %c0_20 = arith.constant 0 : index
    %c0_21 = arith.constant 0 : index
    %111 = vector.load %arg3[%c0_19, %c0_20, %c0_21] : memref<1x8x1024xf32, #tpu.memory_space<vmem>>, vector<1x8x520xf32>
    %112 = vector.shape_cast %111 : vector<1x8x520xf32> to vector<8x520xf32>
    %cst_22 = arith.constant 0.000000e+00 : f32
    %113 = vector.broadcast %cst_22 : f32 to vector<8x516xf32>
    %114 = vector.extract_strided_slice %103 {offsets = [0, 0], sizes = [8, 1], strides = [1, 1]} : vector<8x5xf32> to vector<8x1xf32>
    %115 = vector.extract_strided_slice %112 {offsets = [0, 0], sizes = [8, 516], strides = [1, 1]} : vector<8x520xf32> to vector<8x516xf32>
    %116 = vector.broadcast %114 : vector<8x1xf32> to vector<8x516xf32>
    %117 = arith.mulf %116, %115 : vector<8x516xf32>
    %118 = arith.addf %113, %117 : vector<8x516xf32>
    %119 = vector.extract_strided_slice %103 {offsets = [0, 1], sizes = [8, 1], strides = [1, 1]} : vector<8x5xf32> to vector<8x1xf32>
    %120 = vector.extract_strided_slice %112 {offsets = [0, 1], sizes = [8, 516], strides = [1, 1]} : vector<8x520xf32> to vector<8x516xf32>
    %121 = vector.broadcast %119 : vector<8x1xf32> to vector<8x516xf32>
    %122 = arith.mulf %121, %120 : vector<8x516xf32>
    %123 = arith.addf %118, %122 : vector<8x516xf32>
    %124 = vector.extract_strided_slice %103 {offsets = [0, 2], sizes = [8, 1], strides = [1, 1]} : vector<8x5xf32> to vector<8x1xf32>
    %125 = vector.extract_strided_slice %112 {offsets = [0, 2], sizes = [8, 516], strides = [1, 1]} : vector<8x520xf32> to vector<8x516xf32>
    %126 = vector.broadcast %124 : vector<8x1xf32> to vector<8x516xf32>
    %127 = arith.mulf %126, %125 : vector<8x516xf32>
    %128 = arith.addf %123, %127 : vector<8x516xf32>
    %129 = vector.extract_strided_slice %103 {offsets = [0, 3], sizes = [8, 1], strides = [1, 1]} : vector<8x5xf32> to vector<8x1xf32>
    %130 = vector.extract_strided_slice %112 {offsets = [0, 3], sizes = [8, 516], strides = [1, 1]} : vector<8x520xf32> to vector<8x516xf32>
    %131 = vector.broadcast %129 : vector<8x1xf32> to vector<8x516xf32>
    %132 = arith.mulf %131, %130 : vector<8x516xf32>
    %133 = arith.addf %128, %132 : vector<8x516xf32>
    %134 = vector.extract_strided_slice %103 {offsets = [0, 4], sizes = [8, 1], strides = [1, 1]} : vector<8x5xf32> to vector<8x1xf32>
    %135 = vector.extract_strided_slice %112 {offsets = [0, 4], sizes = [8, 516], strides = [1, 1]} : vector<8x520xf32> to vector<8x516xf32>
    %136 = vector.broadcast %134 : vector<8x1xf32> to vector<8x516xf32>
    %137 = arith.mulf %136, %135 : vector<8x516xf32>
    %138 = arith.addf %133, %137 : vector<8x516xf32>
    %139 = vector.broadcast %107 : vector<8x1xf32> to vector<8x516xf32>
    %140 = arith.addf %138, %139 : vector<8x516xf32>
    %cst_23 = arith.constant 0.000000e+00 : f32
    %141 = vector.broadcast %cst_23 : f32 to vector<8x516xf32>
    %142 = arith.maximumf %140, %141 : vector<8x516xf32>
    %cst_24 = arith.constant 0.000000e+00 : f32
    %143 = vector.broadcast %cst_24 : f32 to vector<8x512xf32>
    %144 = vector.extract_strided_slice %105 {offsets = [0, 0], sizes = [8, 1], strides = [1, 1]} : vector<8x5xf32> to vector<8x1xf32>
    %145 = vector.extract_strided_slice %142 {offsets = [0, 0], sizes = [8, 512], strides = [1, 1]} : vector<8x516xf32> to vector<8x512xf32>
    %146 = vector.broadcast %144 : vector<8x1xf32> to vector<8x512xf32>
    %147 = arith.mulf %146, %145 : vector<8x512xf32>
    %148 = arith.addf %143, %147 : vector<8x512xf32>
    %149 = vector.extract_strided_slice %105 {offsets = [0, 1], sizes = [8, 1], strides = [1, 1]} : vector<8x5xf32> to vector<8x1xf32>
    %150 = vector.extract_strided_slice %142 {offsets = [0, 1], sizes = [8, 512], strides = [1, 1]} : vector<8x516xf32> to vector<8x512xf32>
    %151 = vector.broadcast %149 : vector<8x1xf32> to vector<8x512xf32>
    %152 = arith.mulf %151, %150 : vector<8x512xf32>
    %153 = arith.addf %148, %152 : vector<8x512xf32>
    %154 = vector.extract_strided_slice %105 {offsets = [0, 2], sizes = [8, 1], strides = [1, 1]} : vector<8x5xf32> to vector<8x1xf32>
    %155 = vector.extract_strided_slice %142 {offsets = [0, 2], sizes = [8, 512], strides = [1, 1]} : vector<8x516xf32> to vector<8x512xf32>
    %156 = vector.broadcast %154 : vector<8x1xf32> to vector<8x512xf32>
    %157 = arith.mulf %156, %155 : vector<8x512xf32>
    %158 = arith.addf %153, %157 : vector<8x512xf32>
    %159 = vector.extract_strided_slice %105 {offsets = [0, 3], sizes = [8, 1], strides = [1, 1]} : vector<8x5xf32> to vector<8x1xf32>
    %160 = vector.extract_strided_slice %142 {offsets = [0, 3], sizes = [8, 512], strides = [1, 1]} : vector<8x516xf32> to vector<8x512xf32>
    %161 = vector.broadcast %159 : vector<8x1xf32> to vector<8x512xf32>
    %162 = arith.mulf %161, %160 : vector<8x512xf32>
    %163 = arith.addf %158, %162 : vector<8x512xf32>
    %164 = vector.extract_strided_slice %105 {offsets = [0, 4], sizes = [8, 1], strides = [1, 1]} : vector<8x5xf32> to vector<8x1xf32>
    %165 = vector.extract_strided_slice %142 {offsets = [0, 4], sizes = [8, 512], strides = [1, 1]} : vector<8x516xf32> to vector<8x512xf32>
    %166 = vector.broadcast %164 : vector<8x1xf32> to vector<8x512xf32>
    %167 = arith.mulf %166, %165 : vector<8x512xf32>
    %168 = arith.addf %163, %167 : vector<8x512xf32>
    %169 = vector.broadcast %109 : vector<8x1xf32> to vector<8x512xf32>
    %170 = arith.addf %168, %169 : vector<8x512xf32>
    %cst_25 = arith.constant 0.000000e+00 : f32
    %171 = vector.broadcast %cst_25 : f32 to vector<8x512xf32>
    %172 = arith.maximumf %170, %171 : vector<8x512xf32>
    %cst_26 = arith.constant dense<0.000000e+00> : vector<8xf32>
    %173 = vector.multi_reduction <add>, %172, %cst_26 [1] : vector<8x512xf32> to vector<8xf32>
    %174 = vector.shape_cast %173 : vector<8xf32> to vector<8x1xf32>
    %175 = arith.addf %110, %174 : vector<8x1xf32>
    %c0_27 = arith.constant 0 : index
    %c0_28 = arith.constant 0 : index
    %c512_29 = arith.constant 512 : index
    %176 = vector.load %arg3[%c0_27, %c0_28, %c512_29] : memref<1x8x1024xf32, #tpu.memory_space<vmem>>, vector<1x8x512xf32>
    %177 = vector.shape_cast %176 : vector<1x8x512xf32> to vector<8x512xf32>
    %cst_30 = arith.constant 0.000000e+00 : f32
    %178 = vector.broadcast %cst_30 : f32 to vector<8x508xf32>
    %179 = vector.extract_strided_slice %103 {offsets = [0, 0], sizes = [8, 1], strides = [1, 1]} : vector<8x5xf32> to vector<8x1xf32>
    %180 = vector.extract_strided_slice %177 {offsets = [0, 0], sizes = [8, 508], strides = [1, 1]} : vector<8x512xf32> to vector<8x508xf32>
    %181 = vector.broadcast %179 : vector<8x1xf32> to vector<8x508xf32>
    %182 = arith.mulf %181, %180 : vector<8x508xf32>
    %183 = arith.addf %178, %182 : vector<8x508xf32>
    %184 = vector.extract_strided_slice %103 {offsets = [0, 1], sizes = [8, 1], strides = [1, 1]} : vector<8x5xf32> to vector<8x1xf32>
    %185 = vector.extract_strided_slice %177 {offsets = [0, 1], sizes = [8, 508], strides = [1, 1]} : vector<8x512xf32> to vector<8x508xf32>
    %186 = vector.broadcast %184 : vector<8x1xf32> to vector<8x508xf32>
    %187 = arith.mulf %186, %185 : vector<8x508xf32>
    %188 = arith.addf %183, %187 : vector<8x508xf32>
    %189 = vector.extract_strided_slice %103 {offsets = [0, 2], sizes = [8, 1], strides = [1, 1]} : vector<8x5xf32> to vector<8x1xf32>
    %190 = vector.extract_strided_slice %177 {offsets = [0, 2], sizes = [8, 508], strides = [1, 1]} : vector<8x512xf32> to vector<8x508xf32>
    %191 = vector.broadcast %189 : vector<8x1xf32> to vector<8x508xf32>
    %192 = arith.mulf %191, %190 : vector<8x508xf32>
    %193 = arith.addf %188, %192 : vector<8x508xf32>
    %194 = vector.extract_strided_slice %103 {offsets = [0, 3], sizes = [8, 1], strides = [1, 1]} : vector<8x5xf32> to vector<8x1xf32>
    %195 = vector.extract_strided_slice %177 {offsets = [0, 3], sizes = [8, 508], strides = [1, 1]} : vector<8x512xf32> to vector<8x508xf32>
    %196 = vector.broadcast %194 : vector<8x1xf32> to vector<8x508xf32>
    %197 = arith.mulf %196, %195 : vector<8x508xf32>
    %198 = arith.addf %193, %197 : vector<8x508xf32>
    %199 = vector.extract_strided_slice %103 {offsets = [0, 4], sizes = [8, 1], strides = [1, 1]} : vector<8x5xf32> to vector<8x1xf32>
    %200 = vector.extract_strided_slice %177 {offsets = [0, 4], sizes = [8, 508], strides = [1, 1]} : vector<8x512xf32> to vector<8x508xf32>
    %201 = vector.broadcast %199 : vector<8x1xf32> to vector<8x508xf32>
    %202 = arith.mulf %201, %200 : vector<8x508xf32>
    %203 = arith.addf %198, %202 : vector<8x508xf32>
    %204 = vector.broadcast %107 : vector<8x1xf32> to vector<8x508xf32>
    %205 = arith.addf %203, %204 : vector<8x508xf32>
    %cst_31 = arith.constant 0.000000e+00 : f32
    %206 = vector.broadcast %cst_31 : f32 to vector<8x508xf32>
    %207 = arith.maximumf %205, %206 : vector<8x508xf32>
    %cst_32 = arith.constant 0.000000e+00 : f32
    %208 = vector.broadcast %cst_32 : f32 to vector<8x504xf32>
    %209 = vector.extract_strided_slice %105 {offsets = [0, 0], sizes = [8, 1], strides = [1, 1]} : vector<8x5xf32> to vector<8x1xf32>
    %210 = vector.extract_strided_slice %207 {offsets = [0, 0], sizes = [8, 504], strides = [1, 1]} : vector<8x508xf32> to vector<8x504xf32>
    %211 = vector.broadcast %209 : vector<8x1xf32> to vector<8x504xf32>
    %212 = arith.mulf %211, %210 : vector<8x504xf32>
    %213 = arith.addf %208, %212 : vector<8x504xf32>
    %214 = vector.extract_strided_slice %105 {offsets = [0, 1], sizes = [8, 1], strides = [1, 1]} : vector<8x5xf32> to vector<8x1xf32>
    %215 = vector.extract_strided_slice %207 {offsets = [0, 1], sizes = [8, 504], strides = [1, 1]} : vector<8x508xf32> to vector<8x504xf32>
    %216 = vector.broadcast %214 : vector<8x1xf32> to vector<8x504xf32>
    %217 = arith.mulf %216, %215 : vector<8x504xf32>
    %218 = arith.addf %213, %217 : vector<8x504xf32>
    %219 = vector.extract_strided_slice %105 {offsets = [0, 2], sizes = [8, 1], strides = [1, 1]} : vector<8x5xf32> to vector<8x1xf32>
    %220 = vector.extract_strided_slice %207 {offsets = [0, 2], sizes = [8, 504], strides = [1, 1]} : vector<8x508xf32> to vector<8x504xf32>
    %221 = vector.broadcast %219 : vector<8x1xf32> to vector<8x504xf32>
    %222 = arith.mulf %221, %220 : vector<8x504xf32>
    %223 = arith.addf %218, %222 : vector<8x504xf32>
    %224 = vector.extract_strided_slice %105 {offsets = [0, 3], sizes = [8, 1], strides = [1, 1]} : vector<8x5xf32> to vector<8x1xf32>
    %225 = vector.extract_strided_slice %207 {offsets = [0, 3], sizes = [8, 504], strides = [1, 1]} : vector<8x508xf32> to vector<8x504xf32>
    %226 = vector.broadcast %224 : vector<8x1xf32> to vector<8x504xf32>
    %227 = arith.mulf %226, %225 : vector<8x504xf32>
    %228 = arith.addf %223, %227 : vector<8x504xf32>
    %229 = vector.extract_strided_slice %105 {offsets = [0, 4], sizes = [8, 1], strides = [1, 1]} : vector<8x5xf32> to vector<8x1xf32>
    %230 = vector.extract_strided_slice %207 {offsets = [0, 4], sizes = [8, 504], strides = [1, 1]} : vector<8x508xf32> to vector<8x504xf32>
    %231 = vector.broadcast %229 : vector<8x1xf32> to vector<8x504xf32>
    %232 = arith.mulf %231, %230 : vector<8x504xf32>
    %233 = arith.addf %228, %232 : vector<8x504xf32>
    %234 = vector.broadcast %109 : vector<8x1xf32> to vector<8x504xf32>
    %235 = arith.addf %233, %234 : vector<8x504xf32>
    %cst_33 = arith.constant 0.000000e+00 : f32
    %236 = vector.broadcast %cst_33 : f32 to vector<8x504xf32>
    %237 = arith.maximumf %235, %236 : vector<8x504xf32>
    %cst_34 = arith.constant dense<0.000000e+00> : vector<8xf32>
    %238 = vector.multi_reduction <add>, %237, %cst_34 [1] : vector<8x504xf32> to vector<8xf32>
    %239 = vector.shape_cast %238 : vector<8xf32> to vector<8x1xf32>
    %240 = arith.addf %175, %239 : vector<8x1xf32>
    %cst_35 = arith.constant 9.842520e-04 : f32
    %241 = vector.broadcast %cst_35 : f32 to vector<8x1xf32>
    %242 = arith.mulf %240, %241 : vector<8x1xf32>
    %243 = vector.extract_strided_slice %0 {offsets = [0, 0, 8], sizes = [1, 8, 10], strides = [1, 1, 1]} : vector<2x8x21xf32> to vector<1x8x10xf32>
    %244 = vector.shape_cast %243 : vector<1x8x10xf32> to vector<8x10xf32>
    %245 = vector.extract_strided_slice %0 {offsets = [1, 0, 8], sizes = [1, 8, 10], strides = [1, 1, 1]} : vector<2x8x21xf32> to vector<1x8x10xf32>
    %246 = vector.shape_cast %245 : vector<1x8x10xf32> to vector<8x10xf32>
    %247 = vector.extract_strided_slice %0 {offsets = [0, 0, 20], sizes = [1, 8, 1], strides = [1, 1, 1]} : vector<2x8x21xf32> to vector<1x8x1xf32>
    %248 = vector.shape_cast %247 : vector<1x8x1xf32> to vector<8x1xf32>
    %249 = vector.extract_strided_slice %0 {offsets = [1, 0, 20], sizes = [1, 8, 1], strides = [1, 1, 1]} : vector<2x8x21xf32> to vector<1x8x1xf32>
    %250 = vector.shape_cast %249 : vector<1x8x1xf32> to vector<8x1xf32>
    %cst_36 = arith.constant 0.000000e+00 : f32
    %251 = vector.broadcast %cst_36 : f32 to vector<8x1xf32>
    %c0_37 = arith.constant 0 : index
    %c0_38 = arith.constant 0 : index
    %c0_39 = arith.constant 0 : index
    %252 = vector.load %arg3[%c0_37, %c0_38, %c0_39] : memref<1x8x1024xf32, #tpu.memory_space<vmem>>, vector<1x8x530xf32>
    %253 = vector.shape_cast %252 : vector<1x8x530xf32> to vector<8x530xf32>
    %cst_40 = arith.constant 0.000000e+00 : f32
    %254 = vector.broadcast %cst_40 : f32 to vector<8x521xf32>
    %255 = vector.extract_strided_slice %244 {offsets = [0, 0], sizes = [8, 1], strides = [1, 1]} : vector<8x10xf32> to vector<8x1xf32>
    %256 = vector.extract_strided_slice %253 {offsets = [0, 0], sizes = [8, 521], strides = [1, 1]} : vector<8x530xf32> to vector<8x521xf32>
    %257 = vector.broadcast %255 : vector<8x1xf32> to vector<8x521xf32>
    %258 = arith.mulf %257, %256 : vector<8x521xf32>
    %259 = arith.addf %254, %258 : vector<8x521xf32>
    %260 = vector.extract_strided_slice %244 {offsets = [0, 1], sizes = [8, 1], strides = [1, 1]} : vector<8x10xf32> to vector<8x1xf32>
    %261 = vector.extract_strided_slice %253 {offsets = [0, 1], sizes = [8, 521], strides = [1, 1]} : vector<8x530xf32> to vector<8x521xf32>
    %262 = vector.broadcast %260 : vector<8x1xf32> to vector<8x521xf32>
    %263 = arith.mulf %262, %261 : vector<8x521xf32>
    %264 = arith.addf %259, %263 : vector<8x521xf32>
    %265 = vector.extract_strided_slice %244 {offsets = [0, 2], sizes = [8, 1], strides = [1, 1]} : vector<8x10xf32> to vector<8x1xf32>
    %266 = vector.extract_strided_slice %253 {offsets = [0, 2], sizes = [8, 521], strides = [1, 1]} : vector<8x530xf32> to vector<8x521xf32>
    %267 = vector.broadcast %265 : vector<8x1xf32> to vector<8x521xf32>
    %268 = arith.mulf %267, %266 : vector<8x521xf32>
    %269 = arith.addf %264, %268 : vector<8x521xf32>
    %270 = vector.extract_strided_slice %244 {offsets = [0, 3], sizes = [8, 1], strides = [1, 1]} : vector<8x10xf32> to vector<8x1xf32>
    %271 = vector.extract_strided_slice %253 {offsets = [0, 3], sizes = [8, 521], strides = [1, 1]} : vector<8x530xf32> to vector<8x521xf32>
    %272 = vector.broadcast %270 : vector<8x1xf32> to vector<8x521xf32>
    %273 = arith.mulf %272, %271 : vector<8x521xf32>
    %274 = arith.addf %269, %273 : vector<8x521xf32>
    %275 = vector.extract_strided_slice %244 {offsets = [0, 4], sizes = [8, 1], strides = [1, 1]} : vector<8x10xf32> to vector<8x1xf32>
    %276 = vector.extract_strided_slice %253 {offsets = [0, 4], sizes = [8, 521], strides = [1, 1]} : vector<8x530xf32> to vector<8x521xf32>
    %277 = vector.broadcast %275 : vector<8x1xf32> to vector<8x521xf32>
    %278 = arith.mulf %277, %276 : vector<8x521xf32>
    %279 = arith.addf %274, %278 : vector<8x521xf32>
    %280 = vector.extract_strided_slice %244 {offsets = [0, 5], sizes = [8, 1], strides = [1, 1]} : vector<8x10xf32> to vector<8x1xf32>
    %281 = vector.extract_strided_slice %253 {offsets = [0, 5], sizes = [8, 521], strides = [1, 1]} : vector<8x530xf32> to vector<8x521xf32>
    %282 = vector.broadcast %280 : vector<8x1xf32> to vector<8x521xf32>
    %283 = arith.mulf %282, %281 : vector<8x521xf32>
    %284 = arith.addf %279, %283 : vector<8x521xf32>
    %285 = vector.extract_strided_slice %244 {offsets = [0, 6], sizes = [8, 1], strides = [1, 1]} : vector<8x10xf32> to vector<8x1xf32>
    %286 = vector.extract_strided_slice %253 {offsets = [0, 6], sizes = [8, 521], strides = [1, 1]} : vector<8x530xf32> to vector<8x521xf32>
    %287 = vector.broadcast %285 : vector<8x1xf32> to vector<8x521xf32>
    %288 = arith.mulf %287, %286 : vector<8x521xf32>
    %289 = arith.addf %284, %288 : vector<8x521xf32>
    %290 = vector.extract_strided_slice %244 {offsets = [0, 7], sizes = [8, 1], strides = [1, 1]} : vector<8x10xf32> to vector<8x1xf32>
    %291 = vector.extract_strided_slice %253 {offsets = [0, 7], sizes = [8, 521], strides = [1, 1]} : vector<8x530xf32> to vector<8x521xf32>
    %292 = vector.broadcast %290 : vector<8x1xf32> to vector<8x521xf32>
    %293 = arith.mulf %292, %291 : vector<8x521xf32>
    %294 = arith.addf %289, %293 : vector<8x521xf32>
    %295 = vector.extract_strided_slice %244 {offsets = [0, 8], sizes = [8, 1], strides = [1, 1]} : vector<8x10xf32> to vector<8x1xf32>
    %296 = vector.extract_strided_slice %253 {offsets = [0, 8], sizes = [8, 521], strides = [1, 1]} : vector<8x530xf32> to vector<8x521xf32>
    %297 = vector.broadcast %295 : vector<8x1xf32> to vector<8x521xf32>
    %298 = arith.mulf %297, %296 : vector<8x521xf32>
    %299 = arith.addf %294, %298 : vector<8x521xf32>
    %300 = vector.extract_strided_slice %244 {offsets = [0, 9], sizes = [8, 1], strides = [1, 1]} : vector<8x10xf32> to vector<8x1xf32>
    %301 = vector.extract_strided_slice %253 {offsets = [0, 9], sizes = [8, 521], strides = [1, 1]} : vector<8x530xf32> to vector<8x521xf32>
    %302 = vector.broadcast %300 : vector<8x1xf32> to vector<8x521xf32>
    %303 = arith.mulf %302, %301 : vector<8x521xf32>
    %304 = arith.addf %299, %303 : vector<8x521xf32>
    %305 = vector.broadcast %248 : vector<8x1xf32> to vector<8x521xf32>
    %306 = arith.addf %304, %305 : vector<8x521xf32>
    %cst_41 = arith.constant 0.000000e+00 : f32
    %307 = vector.broadcast %cst_41 : f32 to vector<8x521xf32>
    %308 = arith.maximumf %306, %307 : vector<8x521xf32>
    %cst_42 = arith.constant 0.000000e+00 : f32
    %309 = vector.broadcast %cst_42 : f32 to vector<8x512xf32>
    %310 = vector.extract_strided_slice %246 {offsets = [0, 0], sizes = [8, 1], strides = [1, 1]} : vector<8x10xf32> to vector<8x1xf32>
    %311 = vector.extract_strided_slice %308 {offsets = [0, 0], sizes = [8, 512], strides = [1, 1]} : vector<8x521xf32> to vector<8x512xf32>
    %312 = vector.broadcast %310 : vector<8x1xf32> to vector<8x512xf32>
    %313 = arith.mulf %312, %311 : vector<8x512xf32>
    %314 = arith.addf %309, %313 : vector<8x512xf32>
    %315 = vector.extract_strided_slice %246 {offsets = [0, 1], sizes = [8, 1], strides = [1, 1]} : vector<8x10xf32> to vector<8x1xf32>
    %316 = vector.extract_strided_slice %308 {offsets = [0, 1], sizes = [8, 512], strides = [1, 1]} : vector<8x521xf32> to vector<8x512xf32>
    %317 = vector.broadcast %315 : vector<8x1xf32> to vector<8x512xf32>
    %318 = arith.mulf %317, %316 : vector<8x512xf32>
    %319 = arith.addf %314, %318 : vector<8x512xf32>
    %320 = vector.extract_strided_slice %246 {offsets = [0, 2], sizes = [8, 1], strides = [1, 1]} : vector<8x10xf32> to vector<8x1xf32>
    %321 = vector.extract_strided_slice %308 {offsets = [0, 2], sizes = [8, 512], strides = [1, 1]} : vector<8x521xf32> to vector<8x512xf32>
    %322 = vector.broadcast %320 : vector<8x1xf32> to vector<8x512xf32>
    %323 = arith.mulf %322, %321 : vector<8x512xf32>
    %324 = arith.addf %319, %323 : vector<8x512xf32>
    %325 = vector.extract_strided_slice %246 {offsets = [0, 3], sizes = [8, 1], strides = [1, 1]} : vector<8x10xf32> to vector<8x1xf32>
    %326 = vector.extract_strided_slice %308 {offsets = [0, 3], sizes = [8, 512], strides = [1, 1]} : vector<8x521xf32> to vector<8x512xf32>
    %327 = vector.broadcast %325 : vector<8x1xf32> to vector<8x512xf32>
    %328 = arith.mulf %327, %326 : vector<8x512xf32>
    %329 = arith.addf %324, %328 : vector<8x512xf32>
    %330 = vector.extract_strided_slice %246 {offsets = [0, 4], sizes = [8, 1], strides = [1, 1]} : vector<8x10xf32> to vector<8x1xf32>
    %331 = vector.extract_strided_slice %308 {offsets = [0, 4], sizes = [8, 512], strides = [1, 1]} : vector<8x521xf32> to vector<8x512xf32>
    %332 = vector.broadcast %330 : vector<8x1xf32> to vector<8x512xf32>
    %333 = arith.mulf %332, %331 : vector<8x512xf32>
    %334 = arith.addf %329, %333 : vector<8x512xf32>
    %335 = vector.extract_strided_slice %246 {offsets = [0, 5], sizes = [8, 1], strides = [1, 1]} : vector<8x10xf32> to vector<8x1xf32>
    %336 = vector.extract_strided_slice %308 {offsets = [0, 5], sizes = [8, 512], strides = [1, 1]} : vector<8x521xf32> to vector<8x512xf32>
    %337 = vector.broadcast %335 : vector<8x1xf32> to vector<8x512xf32>
    %338 = arith.mulf %337, %336 : vector<8x512xf32>
    %339 = arith.addf %334, %338 : vector<8x512xf32>
    %340 = vector.extract_strided_slice %246 {offsets = [0, 6], sizes = [8, 1], strides = [1, 1]} : vector<8x10xf32> to vector<8x1xf32>
    %341 = vector.extract_strided_slice %308 {offsets = [0, 6], sizes = [8, 512], strides = [1, 1]} : vector<8x521xf32> to vector<8x512xf32>
    %342 = vector.broadcast %340 : vector<8x1xf32> to vector<8x512xf32>
    %343 = arith.mulf %342, %341 : vector<8x512xf32>
    %344 = arith.addf %339, %343 : vector<8x512xf32>
    %345 = vector.extract_strided_slice %246 {offsets = [0, 7], sizes = [8, 1], strides = [1, 1]} : vector<8x10xf32> to vector<8x1xf32>
    %346 = vector.extract_strided_slice %308 {offsets = [0, 7], sizes = [8, 512], strides = [1, 1]} : vector<8x521xf32> to vector<8x512xf32>
    %347 = vector.broadcast %345 : vector<8x1xf32> to vector<8x512xf32>
    %348 = arith.mulf %347, %346 : vector<8x512xf32>
    %349 = arith.addf %344, %348 : vector<8x512xf32>
    %350 = vector.extract_strided_slice %246 {offsets = [0, 8], sizes = [8, 1], strides = [1, 1]} : vector<8x10xf32> to vector<8x1xf32>
    %351 = vector.extract_strided_slice %308 {offsets = [0, 8], sizes = [8, 512], strides = [1, 1]} : vector<8x521xf32> to vector<8x512xf32>
    %352 = vector.broadcast %350 : vector<8x1xf32> to vector<8x512xf32>
    %353 = arith.mulf %352, %351 : vector<8x512xf32>
    %354 = arith.addf %349, %353 : vector<8x512xf32>
    %355 = vector.extract_strided_slice %246 {offsets = [0, 9], sizes = [8, 1], strides = [1, 1]} : vector<8x10xf32> to vector<8x1xf32>
    %356 = vector.extract_strided_slice %308 {offsets = [0, 9], sizes = [8, 512], strides = [1, 1]} : vector<8x521xf32> to vector<8x512xf32>
    %357 = vector.broadcast %355 : vector<8x1xf32> to vector<8x512xf32>
    %358 = arith.mulf %357, %356 : vector<8x512xf32>
    %359 = arith.addf %354, %358 : vector<8x512xf32>
    %360 = vector.broadcast %250 : vector<8x1xf32> to vector<8x512xf32>
    %361 = arith.addf %359, %360 : vector<8x512xf32>
    %cst_43 = arith.constant 0.000000e+00 : f32
    %362 = vector.broadcast %cst_43 : f32 to vector<8x512xf32>
    %363 = arith.maximumf %361, %362 : vector<8x512xf32>
    %cst_44 = arith.constant dense<0.000000e+00> : vector<8xf32>
    %364 = vector.multi_reduction <add>, %363, %cst_44 [1] : vector<8x512xf32> to vector<8xf32>
    %365 = vector.shape_cast %364 : vector<8xf32> to vector<8x1xf32>
    %366 = arith.addf %251, %365 : vector<8x1xf32>
    %c0_45 = arith.constant 0 : index
    %c0_46 = arith.constant 0 : index
    %c512_47 = arith.constant 512 : index
    %367 = vector.load %arg3[%c0_45, %c0_46, %c512_47] : memref<1x8x1024xf32, #tpu.memory_space<vmem>>, vector<1x8x512xf32>
    %368 = vector.shape_cast %367 : vector<1x8x512xf32> to vector<8x512xf32>
    %cst_48 = arith.constant 0.000000e+00 : f32
    %369 = vector.broadcast %cst_48 : f32 to vector<8x503xf32>
    %370 = vector.extract_strided_slice %244 {offsets = [0, 0], sizes = [8, 1], strides = [1, 1]} : vector<8x10xf32> to vector<8x1xf32>
    %371 = vector.extract_strided_slice %368 {offsets = [0, 0], sizes = [8, 503], strides = [1, 1]} : vector<8x512xf32> to vector<8x503xf32>
    %372 = vector.broadcast %370 : vector<8x1xf32> to vector<8x503xf32>
    %373 = arith.mulf %372, %371 : vector<8x503xf32>
    %374 = arith.addf %369, %373 : vector<8x503xf32>
    %375 = vector.extract_strided_slice %244 {offsets = [0, 1], sizes = [8, 1], strides = [1, 1]} : vector<8x10xf32> to vector<8x1xf32>
    %376 = vector.extract_strided_slice %368 {offsets = [0, 1], sizes = [8, 503], strides = [1, 1]} : vector<8x512xf32> to vector<8x503xf32>
    %377 = vector.broadcast %375 : vector<8x1xf32> to vector<8x503xf32>
    %378 = arith.mulf %377, %376 : vector<8x503xf32>
    %379 = arith.addf %374, %378 : vector<8x503xf32>
    %380 = vector.extract_strided_slice %244 {offsets = [0, 2], sizes = [8, 1], strides = [1, 1]} : vector<8x10xf32> to vector<8x1xf32>
    %381 = vector.extract_strided_slice %368 {offsets = [0, 2], sizes = [8, 503], strides = [1, 1]} : vector<8x512xf32> to vector<8x503xf32>
    %382 = vector.broadcast %380 : vector<8x1xf32> to vector<8x503xf32>
    %383 = arith.mulf %382, %381 : vector<8x503xf32>
    %384 = arith.addf %379, %383 : vector<8x503xf32>
    %385 = vector.extract_strided_slice %244 {offsets = [0, 3], sizes = [8, 1], strides = [1, 1]} : vector<8x10xf32> to vector<8x1xf32>
    %386 = vector.extract_strided_slice %368 {offsets = [0, 3], sizes = [8, 503], strides = [1, 1]} : vector<8x512xf32> to vector<8x503xf32>
    %387 = vector.broadcast %385 : vector<8x1xf32> to vector<8x503xf32>
    %388 = arith.mulf %387, %386 : vector<8x503xf32>
    %389 = arith.addf %384, %388 : vector<8x503xf32>
    %390 = vector.extract_strided_slice %244 {offsets = [0, 4], sizes = [8, 1], strides = [1, 1]} : vector<8x10xf32> to vector<8x1xf32>
    %391 = vector.extract_strided_slice %368 {offsets = [0, 4], sizes = [8, 503], strides = [1, 1]} : vector<8x512xf32> to vector<8x503xf32>
    %392 = vector.broadcast %390 : vector<8x1xf32> to vector<8x503xf32>
    %393 = arith.mulf %392, %391 : vector<8x503xf32>
    %394 = arith.addf %389, %393 : vector<8x503xf32>
    %395 = vector.extract_strided_slice %244 {offsets = [0, 5], sizes = [8, 1], strides = [1, 1]} : vector<8x10xf32> to vector<8x1xf32>
    %396 = vector.extract_strided_slice %368 {offsets = [0, 5], sizes = [8, 503], strides = [1, 1]} : vector<8x512xf32> to vector<8x503xf32>
    %397 = vector.broadcast %395 : vector<8x1xf32> to vector<8x503xf32>
    %398 = arith.mulf %397, %396 : vector<8x503xf32>
    %399 = arith.addf %394, %398 : vector<8x503xf32>
    %400 = vector.extract_strided_slice %244 {offsets = [0, 6], sizes = [8, 1], strides = [1, 1]} : vector<8x10xf32> to vector<8x1xf32>
    %401 = vector.extract_strided_slice %368 {offsets = [0, 6], sizes = [8, 503], strides = [1, 1]} : vector<8x512xf32> to vector<8x503xf32>
    %402 = vector.broadcast %400 : vector<8x1xf32> to vector<8x503xf32>
    %403 = arith.mulf %402, %401 : vector<8x503xf32>
    %404 = arith.addf %399, %403 : vector<8x503xf32>
    %405 = vector.extract_strided_slice %244 {offsets = [0, 7], sizes = [8, 1], strides = [1, 1]} : vector<8x10xf32> to vector<8x1xf32>
    %406 = vector.extract_strided_slice %368 {offsets = [0, 7], sizes = [8, 503], strides = [1, 1]} : vector<8x512xf32> to vector<8x503xf32>
    %407 = vector.broadcast %405 : vector<8x1xf32> to vector<8x503xf32>
    %408 = arith.mulf %407, %406 : vector<8x503xf32>
    %409 = arith.addf %404, %408 : vector<8x503xf32>
    %410 = vector.extract_strided_slice %244 {offsets = [0, 8], sizes = [8, 1], strides = [1, 1]} : vector<8x10xf32> to vector<8x1xf32>
    %411 = vector.extract_strided_slice %368 {offsets = [0, 8], sizes = [8, 503], strides = [1, 1]} : vector<8x512xf32> to vector<8x503xf32>
    %412 = vector.broadcast %410 : vector<8x1xf32> to vector<8x503xf32>
    %413 = arith.mulf %412, %411 : vector<8x503xf32>
    %414 = arith.addf %409, %413 : vector<8x503xf32>
    %415 = vector.extract_strided_slice %244 {offsets = [0, 9], sizes = [8, 1], strides = [1, 1]} : vector<8x10xf32> to vector<8x1xf32>
    %416 = vector.extract_strided_slice %368 {offsets = [0, 9], sizes = [8, 503], strides = [1, 1]} : vector<8x512xf32> to vector<8x503xf32>
    %417 = vector.broadcast %415 : vector<8x1xf32> to vector<8x503xf32>
    %418 = arith.mulf %417, %416 : vector<8x503xf32>
    %419 = arith.addf %414, %418 : vector<8x503xf32>
    %420 = vector.broadcast %248 : vector<8x1xf32> to vector<8x503xf32>
    %421 = arith.addf %419, %420 : vector<8x503xf32>
    %cst_49 = arith.constant 0.000000e+00 : f32
    %422 = vector.broadcast %cst_49 : f32 to vector<8x503xf32>
    %423 = arith.maximumf %421, %422 : vector<8x503xf32>
    %cst_50 = arith.constant 0.000000e+00 : f32
    %424 = vector.broadcast %cst_50 : f32 to vector<8x494xf32>
    %425 = vector.extract_strided_slice %246 {offsets = [0, 0], sizes = [8, 1], strides = [1, 1]} : vector<8x10xf32> to vector<8x1xf32>
    %426 = vector.extract_strided_slice %423 {offsets = [0, 0], sizes = [8, 494], strides = [1, 1]} : vector<8x503xf32> to vector<8x494xf32>
    %427 = vector.broadcast %425 : vector<8x1xf32> to vector<8x494xf32>
    %428 = arith.mulf %427, %426 : vector<8x494xf32>
    %429 = arith.addf %424, %428 : vector<8x494xf32>
    %430 = vector.extract_strided_slice %246 {offsets = [0, 1], sizes = [8, 1], strides = [1, 1]} : vector<8x10xf32> to vector<8x1xf32>
    %431 = vector.extract_strided_slice %423 {offsets = [0, 1], sizes = [8, 494], strides = [1, 1]} : vector<8x503xf32> to vector<8x494xf32>
    %432 = vector.broadcast %430 : vector<8x1xf32> to vector<8x494xf32>
    %433 = arith.mulf %432, %431 : vector<8x494xf32>
    %434 = arith.addf %429, %433 : vector<8x494xf32>
    %435 = vector.extract_strided_slice %246 {offsets = [0, 2], sizes = [8, 1], strides = [1, 1]} : vector<8x10xf32> to vector<8x1xf32>
    %436 = vector.extract_strided_slice %423 {offsets = [0, 2], sizes = [8, 494], strides = [1, 1]} : vector<8x503xf32> to vector<8x494xf32>
    %437 = vector.broadcast %435 : vector<8x1xf32> to vector<8x494xf32>
    %438 = arith.mulf %437, %436 : vector<8x494xf32>
    %439 = arith.addf %434, %438 : vector<8x494xf32>
    %440 = vector.extract_strided_slice %246 {offsets = [0, 3], sizes = [8, 1], strides = [1, 1]} : vector<8x10xf32> to vector<8x1xf32>
    %441 = vector.extract_strided_slice %423 {offsets = [0, 3], sizes = [8, 494], strides = [1, 1]} : vector<8x503xf32> to vector<8x494xf32>
    %442 = vector.broadcast %440 : vector<8x1xf32> to vector<8x494xf32>
    %443 = arith.mulf %442, %441 : vector<8x494xf32>
    %444 = arith.addf %439, %443 : vector<8x494xf32>
    %445 = vector.extract_strided_slice %246 {offsets = [0, 4], sizes = [8, 1], strides = [1, 1]} : vector<8x10xf32> to vector<8x1xf32>
    %446 = vector.extract_strided_slice %423 {offsets = [0, 4], sizes = [8, 494], strides = [1, 1]} : vector<8x503xf32> to vector<8x494xf32>
    %447 = vector.broadcast %445 : vector<8x1xf32> to vector<8x494xf32>
    %448 = arith.mulf %447, %446 : vector<8x494xf32>
    %449 = arith.addf %444, %448 : vector<8x494xf32>
    %450 = vector.extract_strided_slice %246 {offsets = [0, 5], sizes = [8, 1], strides = [1, 1]} : vector<8x10xf32> to vector<8x1xf32>
    %451 = vector.extract_strided_slice %423 {offsets = [0, 5], sizes = [8, 494], strides = [1, 1]} : vector<8x503xf32> to vector<8x494xf32>
    %452 = vector.broadcast %450 : vector<8x1xf32> to vector<8x494xf32>
    %453 = arith.mulf %452, %451 : vector<8x494xf32>
    %454 = arith.addf %449, %453 : vector<8x494xf32>
    %455 = vector.extract_strided_slice %246 {offsets = [0, 6], sizes = [8, 1], strides = [1, 1]} : vector<8x10xf32> to vector<8x1xf32>
    %456 = vector.extract_strided_slice %423 {offsets = [0, 6], sizes = [8, 494], strides = [1, 1]} : vector<8x503xf32> to vector<8x494xf32>
    %457 = vector.broadcast %455 : vector<8x1xf32> to vector<8x494xf32>
    %458 = arith.mulf %457, %456 : vector<8x494xf32>
    %459 = arith.addf %454, %458 : vector<8x494xf32>
    %460 = vector.extract_strided_slice %246 {offsets = [0, 7], sizes = [8, 1], strides = [1, 1]} : vector<8x10xf32> to vector<8x1xf32>
    %461 = vector.extract_strided_slice %423 {offsets = [0, 7], sizes = [8, 494], strides = [1, 1]} : vector<8x503xf32> to vector<8x494xf32>
    %462 = vector.broadcast %460 : vector<8x1xf32> to vector<8x494xf32>
    %463 = arith.mulf %462, %461 : vector<8x494xf32>
    %464 = arith.addf %459, %463 : vector<8x494xf32>
    %465 = vector.extract_strided_slice %246 {offsets = [0, 8], sizes = [8, 1], strides = [1, 1]} : vector<8x10xf32> to vector<8x1xf32>
    %466 = vector.extract_strided_slice %423 {offsets = [0, 8], sizes = [8, 494], strides = [1, 1]} : vector<8x503xf32> to vector<8x494xf32>
    %467 = vector.broadcast %465 : vector<8x1xf32> to vector<8x494xf32>
    %468 = arith.mulf %467, %466 : vector<8x494xf32>
    %469 = arith.addf %464, %468 : vector<8x494xf32>
    %470 = vector.extract_strided_slice %246 {offsets = [0, 9], sizes = [8, 1], strides = [1, 1]} : vector<8x10xf32> to vector<8x1xf32>
    %471 = vector.extract_strided_slice %423 {offsets = [0, 9], sizes = [8, 494], strides = [1, 1]} : vector<8x503xf32> to vector<8x494xf32>
    %472 = vector.broadcast %470 : vector<8x1xf32> to vector<8x494xf32>
    %473 = arith.mulf %472, %471 : vector<8x494xf32>
    %474 = arith.addf %469, %473 : vector<8x494xf32>
    %475 = vector.broadcast %250 : vector<8x1xf32> to vector<8x494xf32>
    %476 = arith.addf %474, %475 : vector<8x494xf32>
    %cst_51 = arith.constant 0.000000e+00 : f32
    %477 = vector.broadcast %cst_51 : f32 to vector<8x494xf32>
    %478 = arith.maximumf %476, %477 : vector<8x494xf32>
    %cst_52 = arith.constant dense<0.000000e+00> : vector<8xf32>
    %479 = vector.multi_reduction <add>, %478, %cst_52 [1] : vector<8x494xf32> to vector<8xf32>
    %480 = vector.shape_cast %479 : vector<8xf32> to vector<8x1xf32>
    %481 = arith.addf %366, %480 : vector<8x1xf32>
    %cst_53 = arith.constant 9.94035741E-4 : f32
    %482 = vector.broadcast %cst_53 : f32 to vector<8x1xf32>
    %483 = arith.mulf %481, %482 : vector<8x1xf32>
    %c0_54 = arith.constant 0 : index
    %484 = memref.load %arg2[%c0_54] : memref<4xf32, #tpu.memory_space<smem>>
    %485 = vector.broadcast %484 : f32 to vector<8x1xf32>
    %486 = arith.mulf %485, %101 : vector<8x1xf32>
    %c1 = arith.constant 1 : index
    %487 = memref.load %arg2[%c1] : memref<4xf32, #tpu.memory_space<smem>>
    %488 = vector.broadcast %487 : f32 to vector<8x1xf32>
    %489 = arith.mulf %488, %242 : vector<8x1xf32>
    %490 = arith.addf %486, %489 : vector<8x1xf32>
    %c2 = arith.constant 2 : index
    %491 = memref.load %arg2[%c2] : memref<4xf32, #tpu.memory_space<smem>>
    %492 = vector.broadcast %491 : f32 to vector<8x1xf32>
    %493 = arith.mulf %492, %483 : vector<8x1xf32>
    %494 = arith.addf %490, %493 : vector<8x1xf32>
    %c3 = arith.constant 3 : index
    %495 = memref.load %arg2[%c3] : memref<4xf32, #tpu.memory_space<smem>>
    %496 = vector.broadcast %495 : f32 to vector<8x1xf32>
    %497 = arith.addf %494, %496 : vector<8x1xf32>
    %c0_55 = arith.constant 0 : index
    %c0_56 = arith.constant 0 : index
    %c0_57 = arith.constant 0 : index
    %498 = vector.load %arg5[%c0_55, %c0_56, %c0_57] : memref<1x8x1xf32, #tpu.memory_space<vmem>>, vector<1x8x1xf32>
    %499 = vector.shape_cast %498 : vector<1x8x1xf32> to vector<8x1xf32>
    %500 = vector.shape_cast %497 : vector<8x1xf32> to vector<1x8x1xf32>
    tpu.vector_store %arg5[%c0_55, %c0_56, %c0_57], %500 {strides = array<i32>} : memref<1x8x1xf32, #tpu.memory_space<vmem>>, vector<1x8x1xf32>,
    return
  }
  func.func @transform_0(%arg0: i32, %arg1: i32) -> i32 {
    %c0_i32 = arith.constant 0 : i32
    %c0_i32_0 = arith.constant 0 : i32
    return %c0_i32 : i32
  }
  func.func @transform_1(%arg0: i32, %arg1: i32) -> (i32, i32, i32) {
    %c0_i32 = arith.constant 0 : i32
    %c0_i32_0 = arith.constant 0 : i32
    return %arg1, %arg0, %c0_i32 : i32, i32, i32
  }
  func.func @transform_2(%arg0: i32, %arg1: i32) -> (i32, i32, i32) {
    %c0_i32 = arith.constant 0 : i32
    %c0_i32_0 = arith.constant 0 : i32
    %c0_i32_1 = arith.constant 0 : i32
    return %c0_i32, %arg0, %c0_i32_0 : i32, i32, i32
  }
  func.func @transform_3(%arg0: i32, %arg1: i32) -> (i32, i32, i32) {
    %c0_i32 = arith.constant 0 : i32
    %c0_i32_0 = arith.constant 0 : i32
    return %arg1, %arg0, %c0_i32 : i32, i32, i32
  }
}

</mosaic_0001>

<llo_original>
// kernel: tpu_custom_call.1
$region0: #{tpu_custom_call.1}
  #allocation0 [shape = 'u32[]', space=smem, size = 0x4, offset = 0x4, fixed_abs, tag = 'smem constant byte address 0x4 - core index']
  #allocation1 [shape = 'u32[144,128]{1,0:T(1,128)}', space=vmem, size = 0x12000, scoped, tag = 'internal scratch']
  %s0 = inlined_call_operand.hbm [shape: f32[4], index: 0, kind: input, shape index: {}]
  %s1 = inlined_call_operand.hbm [shape: f32[2,8,1024], index: 1, kind: input, shape index: {}]
  %s2 = inlined_call_operand.hbm [shape: f32[2,8,21], index: 2, kind: input, shape index: {}]
  %s3 = inlined_call_operand.vmem [shape: f32[2,8,1], index: 3, kind: output, shape index: {}]
  %s4 = sld [smem:[#allocation0]]
  $region57: #{tpu_custom_call.1} parent=0
    _
  %s6 = ssub.s32 1, %s4
  %s7 = scalar_select 0, %s6, %s4
  $region1: #{tpu_custom_call.1} parent=0
    #allocation2 [shape = 'u8[512]{0}', space=smem, size = 0x200, scoped, tag = 'input window, operand 0, single buffered']
    #allocation3 [shape = 's32[2]{0}', space=sflag, size = 0x8, scoped, tag = 'scoped memory for tpu_custom_call.1']
    #allocation4 [shape = 's32[2]{0}', space=sflag, size = 0x8, scoped, tag = 'scoped memory for tpu_custom_call.1']
    #allocation5 [shape = 'u8[65536]{0}', space=vmem, size = 0x10000, scoped, tag = 'input window, operand 1']
    #allocation6 [shape = 'u8[8192]{0}', space=vmem, size = 0x2000, scoped, tag = 'input window, operand 2, single buffered']
    #allocation7 [shape = 's32[1]{0}', space=sflag, size = 0x4, scoped, tag = 'scoped memory for tpu_custom_call.1']
    %8 = vsyncpa [#allocation4], 0
    %9 = vsyncpa [#allocation3], 0
    %s10 = scalar_lea.sflag [#allocation3], 1
    %11 = vsyncpa %s10, 0
    %12 = vsyncpa [#allocation7], 0
    loop: start=0, step=1, limit=4
    $region2: #{tpu_custom_call.1} parent=1 // loop_pre_header
      _
    $region3: #{tpu_custom_call.1} parent=1 // loop_header
      %s14 = sphi 0, %s18
      %p15 = scmp.ge.s32.totalorder %s14, 4
      %s21 = sphi 0, %s33
      %s22 = sphi 0, %s29
      %s23 = sphi 0, %s21
      %s24 = sphi 0, %s22
      %s25 = sphi 0, %s23
      %s26 = sphi 0, %s24
      %s34 = sphi 0, %s34
      %s36 = sphi 0, %s34
      %s37 = sphi 0, %s36
      %s51 = sphi 0, %s37
      %s59 = sphi 0, %s61
      %s62 = sphi 0, %s59
      %s63 = sphi 0, %s62
      %s79 = sphi 0, %s63
      %s85 = sphi 0, %s87
      %s88 = sphi 0, %s85
      %s89 = sphi 0, %s88
      %s105 = sphi 0, %s89
      %s113 = sphi 0, %s115
      %s116 = sphi 0, %s113
      %s117 = sphi 0, %s116
      %s133 = sphi 0, %s117
    $region4: #{tpu_custom_call.1} parent=1 // loop_header_branch
      %17 = sbr.rel (%p15) target = $region8
    $region5: #{tpu_custom_call.1} parent=1 // loop_body
      %s19 = ssub.s32 %s14, 1
      %s20 = ssub.s32 %s14, 2
      %s27 = sadd.s32 1, %s22
      %p28 = scmp.ge.s32.totalorder %s27, 2
      %s29 = scalar_select %p28, 0, %s27
      %s30 = sadd.s32 1, %s21
      %s31 = scalar_select %p28, %s30, %s21
      %p32 = scmp.ge.s32.totalorder %s31, 1
      %s33 = scalar_select %p32, 0, %s31
      %s35 = sadd.s32 %s34, 1
      %p38 = scmp.eq.s32.totalorder %s14, 1
      %p39 = scmp.ne.s32.totalorder %s34, %s36
      %p40 = scmp.eq.s32.totalorder %s14, 0
      %p41 = por %p39, %p40
      %p42 = scmp.ne.s32.totalorder %s34, %s36
      %p43 = scmp.eq.s32.totalorder %s19, 1
      %p44 = por %p42, %p43
      %p45 = scmp.ne.s32.totalorder %s36, %s37
      %p46 = scmp.eq.s32.totalorder %s19, 0
      %p47 = por %p45, %p46
      %p48 = scmp.ne.s32.totalorder %s36, %s37
      %p49 = scmp.eq.s32.totalorder %s20, 1
      %p50 = por %p48, %p49
      %p52 = scmp.ne.s32.totalorder %s37, %s51
      %p53 = scmp.eq.s32.totalorder %s20, 0
      %p54 = por %p52, %p53
      %s55 = ssub.s32 %s22, %s29
      %s56 = ssub.s32 %s21, %s33
      %s57 = sor.u32 %s55, %s56
      %p58 = scmp.eq.s32.totalorder %s57, 0
      %s60 = sadd.s32 %s59, 1
      %s61 = scalar_select %p58, %s59, %s60
      %p64 = pneg %p58
      %p65 = scmp.eq.s32.totalorder %s14, 1
      %p66 = por %p64, %p65
      %p67 = scmp.ne.s32.totalorder %s59, %s62
      %p68 = scmp.eq.s32.totalorder %s14, 0
      %p69 = por %p67, %p68
      %p70 = scmp.ne.s32.totalorder %s59, %s62
      %p71 = scmp.eq.s32.totalorder %s19, 1
      %p72 = por %p70, %p71
      %p73 = scmp.ne.s32.totalorder %s62, %s63
      %p74 = scmp.eq.s32.totalorder %s19, 0
      %p75 = por %p73, %p74
      %p76 = scmp.ne.s32.totalorder %s62, %s63
      %p77 = scmp.eq.s32.totalorder %s20, 1
      %p78 = por %p76, %p77
      %p80 = scmp.ne.s32.totalorder %s63, %s79
      %p81 = scmp.eq.s32.totalorder %s20, 0
      %p82 = por %p80, %p81
      %s83 = ssub.s32 %s21, %s33
      %p84 = scmp.eq.s32.totalorder %s83, 0
      %s86 = sadd.s32 %s85, 1
      %s87 = scalar_select %p84, %s85, %s86
      %p90 = pneg %p84
      %p91 = scmp.eq.s32.totalorder %s14, 1
      %p92 = por %p90, %p91
      %p93 = scmp.ne.s32.totalorder %s85, %s88
      %p94 = scmp.eq.s32.totalorder %s14, 0
      %p95 = por %p93, %p94
      %p96 = scmp.ne.s32.totalorder %s85, %s88
      %p97 = scmp.eq.s32.totalorder %s19, 1
      %p98 = por %p96, %p97
      %p99 = scmp.ne.s32.totalorder %s88, %s89
      %p100 = scmp.eq.s32.totalorder %s19, 0
      %p101 = por %p99, %p100
      %p102 = scmp.ne.s32.totalorder %s88, %s89
      %p103 = scmp.eq.s32.totalorder %s20, 1
      %p104 = por %p102, %p103
      %p106 = scmp.ne.s32.totalorder %s89, %s105
      %p107 = scmp.eq.s32.totalorder %s20, 0
      %p108 = por %p106, %p107
      %s109 = ssub.s32 %s22, %s29
      %s110 = ssub.s32 %s21, %s33
      %s111 = sor.u32 %s109, %s110
      %p112 = scmp.eq.s32.totalorder %s111, 0
      %s114 = sadd.s32 %s113, 1
      %s115 = scalar_select %p112, %s113, %s114
      %p118 = pneg %p112
      %p119 = scmp.eq.s32.totalorder %s14, 1
      %p120 = por %p118, %p119
      %p121 = scmp.ne.s32.totalorder %s113, %s116
      %p122 = scmp.eq.s32.totalorder %s14, 0
      %p123 = por %p121, %p122
      %p124 = scmp.ne.s32.totalorder %s113, %s116
      %p125 = scmp.eq.s32.totalorder %s19, 1
      %p126 = por %p124, %p125
      %p127 = scmp.ne.s32.totalorder %s116, %s117
      %p128 = scmp.eq.s32.totalorder %s19, 0
      %p129 = por %p127, %p128
      %p130 = scmp.ne.s32.totalorder %s116, %s117
      %p131 = scmp.eq.s32.totalorder %s20, 1
      %p132 = por %p130, %p131
      %p134 = scmp.ne.s32.totalorder %s117, %s133
      %p135 = scmp.eq.s32.totalorder %s20, 0
      %p136 = por %p134, %p135
      %p137 = scmp.le.s32.totalorder 1, %s14
      %p138 = scmp.lt.s32.totalorder %s14, 3
      %p139 = pnand %p137, %p138
      %p140 = pneg %p139
      // Predicated region
      $region9: #{tpu_custom_call.1} parent=5 // pred_check
        _
      $region10: #{tpu_custom_call.1} parent=5 // pred_check_branch
        %142 = sbr.rel (%p139) target = $region12
      $region11: #{tpu_custom_call.1} parent=5 // pred_region
        %s143 = ssub.s32 %s14, 1
        // Predicated region
        $region13: #{tpu_custom_call.1} parent=11 // pred_check
          %p144 = pneg %p47
        $region14: #{tpu_custom_call.1} parent=11 // pred_check_branch
          %146 = sbr.rel (%p144) target = $region16
        $region15: #{tpu_custom_call.1} parent=11 // pred_region
          %s148 = ssub.s32 16, 16
          %149 = vsyncadd [#allocation4], %s148
          %152 = dma.hbm_to_smem %s0, 16, [#allocation2], [#allocation4]
        $region16: #{tpu_custom_call.1} parent=11 // pred_fallthru
          _
        // Predicated region
        $region17: #{tpu_custom_call.1} parent=11 // pred_check
          %p153 = pneg %p101
        $region18: #{tpu_custom_call.1} parent=11 // pred_check_branch
          %155 = sbr.rel (%p153) target = $region20
        $region19: #{tpu_custom_call.1} parent=11 // pred_region
          %s157 = ssub.s32 256, 256
          %158 = vsyncadd [#allocation7], %s157
          %s159 = smul.addr %s23, 128
          %s160 = scalar_lea.hbm %s2, %s159
          %s161 = sshll.u32 [#allocation6], 4
          %s162 = int_to_ptr.vmem [resolvable:$true] %s161
          %167 = dma.hbm_to_vmem [thread:$0]  %s160, 256, %s162, [#allocation7], 128, 128, 8
        $region20: #{tpu_custom_call.1} parent=11 // pred_fallthru
          _
      $region12: #{tpu_custom_call.1} parent=5 // pred_fallthru
        _
      %p168 = scmp.lt.s32.totalorder %s14, 2
      // Predicated region
      $region21: #{tpu_custom_call.1} parent=5 // pred_check
        %p169 = pneg %p168
      $region22: #{tpu_custom_call.1} parent=5 // pred_check_branch
        %171 = sbr.rel (%p169) target = $region24
      $region23: #{tpu_custom_call.1} parent=5 // pred_region
        // Predicated region
        $region25: #{tpu_custom_call.1} parent=23 // pred_check
          %p172 = pneg %p69
        $region26: #{tpu_custom_call.1} parent=23 // pred_check_branch
          %174 = sbr.rel (%p172) target = $region28
        $region27: #{tpu_custom_call.1} parent=23 // pred_region
          %s175 = sand.u32 %s59, 1
          %s176 = scalar_lea.sflag [#allocation3], %s175
          %s177 = sand.u32 %s59, 1
          %s178 = smul.addr %s177, 64
          %s179 = scalar_lea.vmem [#allocation5], %s178
          %s181 = ssub.s32 1024, 1024
          %182 = vsyncadd %s176, %s181
          %s183 = smul.addr %s21, 8
          %s184 = smul.addr %s22, 8
          %s185 = sadd.s32 %s183, %s184
          %s186 = smul.addr %s185, 128
          %s187 = scalar_lea.hbm %s1, %s186
          %s189 = sshll.u32 %s179, 4
          %s190 = int_to_ptr.vmem [resolvable:$true] %s189
          %192 = dma.hbm_to_vmem [thread:$0]  %s187, 1024, %s190, %s176
        $region28: #{tpu_custom_call.1} parent=23 // pred_fallthru
          _
      $region24: #{tpu_custom_call.1} parent=5 // pred_fallthru
        _
      %p193 = scmp.le.s32.totalorder 1, %s14
      %p194 = scmp.lt.s32.totalorder %s14, 3
      %p195 = pnand %p193, %p194
      %p196 = pneg %p195
      // Predicated region
      $region29: #{tpu_custom_call.1} parent=5 // pred_check
        _
      $region30: #{tpu_custom_call.1} parent=5 // pred_check_branch
        %198 = sbr.rel (%p195) target = $region32
      $region31: #{tpu_custom_call.1} parent=5 // pred_region
        %s199 = ssub.s32 %s14, 1
        // Predicated region
        $region33: #{tpu_custom_call.1} parent=31 // pred_check
          %p200 = pneg %p47
        $region34: #{tpu_custom_call.1} parent=31 // pred_check_branch
          %202 = sbr.rel (%p200) target = $region36
        $region35: #{tpu_custom_call.1} parent=31 // pred_region
          %203 = dma.done [#allocation4], 16
        $region36: #{tpu_custom_call.1} parent=31 // pred_fallthru
          _
        %s204 = sand.u32 %s62, 1
        %s205 = scalar_lea.sflag [#allocation3], %s204
        %s206 = sand.u32 %s62, 1
        %s207 = smul.addr %s206, 64
        %s208 = scalar_lea.vmem [#allocation5], %s207
        // Predicated region
        $region37: #{tpu_custom_call.1} parent=31 // pred_check
          %p209 = pneg %p75
        $region38: #{tpu_custom_call.1} parent=31 // pred_check_branch
          %211 = sbr.rel (%p209) target = $region40
        $region39: #{tpu_custom_call.1} parent=31 // pred_region
          %212 = dma.done %s205, 1024
        $region40: #{tpu_custom_call.1} parent=31 // pred_fallthru
          _
        // Predicated region
        $region41: #{tpu_custom_call.1} parent=31 // pred_check
          %p213 = pneg %p101
        $region42: #{tpu_custom_call.1} parent=31 // pred_check_branch
          %215 = sbr.rel (%p213) target = $region44
        $region43: #{tpu_custom_call.1} parent=31 // pred_region
          %216 = dma.done [#allocation7], 256
        $region44: #{tpu_custom_call.1} parent=31 // pred_fallthru
          _
        %217 = sfence
        %p218 = pneg %p47
        %p219 = pneg %p44
        %s220 = sand.u32 %s62, 1
        %s221 = scalar_lea.sflag [#allocation3], %s220
        %s222 = sand.u32 %s62, 1
        %s223 = smul.addr %s222, 64
        %s224 = scalar_lea.vmem [#allocation5], %s223
        %p225 = pneg %p75
        %p226 = pneg %p72
        %p227 = pneg %p101
        %p228 = pneg %p98
        %p229 = pneg %p129
        %p230 = pneg %p126
        %p231 = scmp.lt.s32.totalorder %s24, 1
        %s232 = scalar_select %p231, %s24, 1
        %p233 = scmp.lt.s32.totalorder %s23, 0
        %s234 = scalar_select %p233, %s23, 0
        %s235 = sadd.s32 %s234, %s232
        %s236 = smul.addr %s235, 8
        %s237 = scalar_lea.vmem %s3, %s236
        %p238 = scmp.lt.s32.totalorder %s24, 1
        %s239 = scalar_select %p238, %s24, 1
        %p240 = scmp.lt.s32.totalorder %s23, 0
        %s241 = scalar_select %p240, %s23, 0
        %s242 = sadd.s32 %s241, %s239
        %s243 = smul.addr %s242, 8
        %s244 = scalar_lea.vmem %s3, %s243
        %v245 = vld [vmem:[#allocation6] sm:$0xff]
        %v246 = vld [vmem:[#allocation6 + $0x8] sm:$0xff]
        %v247 = vld [vmem:[%s208] sm:$0xff]
        %v248 = vld [vmem:[%s208 + $0x8] sm:$0xff]
        %v249 = vld [vmem:[%s208 + $0x10] sm:$0xff]
        %v250 = vld [vmem:[%s208 + $0x18] sm:$0xff]
        %v251 = vld [vmem:[%s208 + $0x20] sm:$0xff]
        %253 = vset.pattern.permute.xlu0 0
        %254 = vperm.xlu0 %253, %v245
        %v255 = vpop.permute.xlu0 %254
        %v257 = vmul.f32 %v255, %v247
        %v258 = vmul.f32 %v255, %v248
        %v259 = vmul.f32 %v255, %v249
        %v260 = vmul.f32 %v255, %v250
        %v261 = vmul.f32 %v255, %v251
        %v262 = vadd.f32 %v257, 0.0
        %v263 = vadd.f32 %v258, 0.0
        %v264 = vadd.f32 %v259, 0.0
        %v265 = vadd.f32 %v260, 0.0
        %v266 = vadd.f32 %v261, 0.0
        %267 = vset.pattern.permute.xlu0 1
        %268 = vperm.xlu0 %267, %v245
        %v269 = vpop.permute.xlu0 %268
        %v271 = vmul.f32 %v269, %v247
        %v272 = vmul.f32 %v269, %v248
        %v273 = vmul.f32 %v269, %v249
        %v274 = vmul.f32 %v269, %v250
        %v275 = vmul.f32 %v269, %v251
        %281 = vrot.lane.b32.xlu0 %v271, 127
        %v282 = vpop.permute.xlu0 %281
        %283 = vrot.lane.b32.xlu0 %v272, 127
        %v284 = vpop.permute.xlu0 %283
        %285 = vrot.lane.b32.xlu0 %v273, 127
        %v286 = vpop.permute.xlu0 %285
        %287 = vrot.lane.b32.xlu0 %v274, 127
        %v288 = vpop.permute.xlu0 %287
        %289 = vrot.lane.b32.xlu0 %v275, 127
        %v290 = vpop.permute.xlu0 %289
        %vm291 = vcmask 1039360
        %v292 = vsel %vm291, %v282, %v284
        %v293 = vsel %vm291, %v284, %v286
        %v294 = vsel %vm291, %v286, %v288
        %v295 = vsel %vm291, %v288, %v290
        %v301 = vadd.f32 %v262, %v292
        %v302 = vadd.f32 %v263, %v293
        %v303 = vadd.f32 %v264, %v294
        %v304 = vadd.f32 %v265, %v295
        %v305 = vadd.f32 %v266, %v290
        %306 = vset.pattern.permute.xlu0 2
        %307 = vperm.xlu0 %306, %v245
        %v308 = vpop.permute.xlu0 %307
        %v310 = vmul.f32 %v308, %v247
        %v311 = vmul.f32 %v308, %v248
        %v312 = vmul.f32 %v308, %v249
        %v313 = vmul.f32 %v308, %v250
        %v314 = vmul.f32 %v308, %v251
        %320 = vrot.lane.b32.xlu0 %v310, 126
        %v321 = vpop.permute.xlu0 %320
        %322 = vrot.lane.b32.xlu0 %v311, 126
        %v323 = vpop.permute.xlu0 %322
        %324 = vrot.lane.b32.xlu0 %v312, 126
        %v325 = vpop.permute.xlu0 %324
        %326 = vrot.lane.b32.xlu0 %v313, 126
        %v327 = vpop.permute.xlu0 %326
        %328 = vrot.lane.b32.xlu0 %v314, 126
        %v329 = vpop.permute.xlu0 %328
        %vm330 = vcmask 1031168
        %v331 = vsel %vm330, %v321, %v323
        %v332 = vsel %vm330, %v323, %v325
        %v333 = vsel %vm330, %v325, %v327
        %v334 = vsel %vm330, %v327, %v329
        %v340 = vadd.f32 %v301, %v331
        %v341 = vadd.f32 %v302, %v332
        %v342 = vadd.f32 %v303, %v333
        %v343 = vadd.f32 %v304, %v334
        %v344 = vadd.f32 %v305, %v329
        %345 = vset.pattern.permute.xlu0 18
        %346 = vperm.xlu0 %345, %v245
        %v347 = vpop.permute.xlu0 %346
        %v349 = vadd.f32 %v340, %v347
        %v350 = vadd.f32 %v341, %v347
        %v351 = vadd.f32 %v342, %v347
        %v352 = vadd.f32 %v343, %v347
        %v353 = vadd.f32 %v344, %v347
        %v354 = vmax.f32 %v349, 0.0
        %v355 = vmax.f32 %v350, 0.0
        %v356 = vmax.f32 %v351, 0.0
        %v357 = vmax.f32 %v352, 0.0
        %v358 = vmax.f32 %v353, 0.0
        %360 = vset.pattern.permute.xlu0 0
        %361 = vperm.xlu0 %360, %v246
        %v362 = vpop.permute.xlu0 %361
        %v364 = vmul.f32 %v362, %v354
        %v365 = vmul.f32 %v362, %v355
        %v366 = vmul.f32 %v362, %v356
        %v367 = vmul.f32 %v362, %v357
        %v368 = vadd.f32 %v364, 0.0
        %v369 = vadd.f32 %v365, 0.0
        %v370 = vadd.f32 %v366, 0.0
        %v371 = vadd.f32 %v367, 0.0
        %372 = vset.pattern.permute.xlu0 1
        %373 = vperm.xlu0 %372, %v246
        %v374 = vpop.permute.xlu0 %373
        %v376 = vmul.f32 %v374, %v354
        %v377 = vmul.f32 %v374, %v355
        %v378 = vmul.f32 %v374, %v356
        %v379 = vmul.f32 %v374, %v357
        %v380 = vmul.f32 %v374, %v358
        %386 = vrot.lane.b32.xlu0 %v376, 127
        %v387 = vpop.permute.xlu0 %386
        %388 = vrot.lane.b32.xlu0 %v377, 127
        %v389 = vpop.permute.xlu0 %388
        %390 = vrot.lane.b32.xlu0 %v378, 127
        %v391 = vpop.permute.xlu0 %390
        %392 = vrot.lane.b32.xlu0 %v379, 127
        %v393 = vpop.permute.xlu0 %392
        %394 = vrot.lane.b32.xlu0 %v380, 127
        %v395 = vpop.permute.xlu0 %394
        %v396 = vsel %vm291, %v387, %v389
        %v397 = vsel %vm291, %v389, %v391
        %v398 = vsel %vm291, %v391, %v393
        %v399 = vsel %vm291, %v393, %v395
        %v404 = vadd.f32 %v368, %v396
        %v405 = vadd.f32 %v369, %v397
        %v406 = vadd.f32 %v370, %v398
        %v407 = vadd.f32 %v371, %v399
        %408 = vset.pattern.permute.xlu0 2
        %409 = vperm.xlu0 %408, %v246
        %v410 = vpop.permute.xlu0 %409
        %v412 = vmul.f32 %v410, %v354
        %v413 = vmul.f32 %v410, %v355
        %v414 = vmul.f32 %v410, %v356
        %v415 = vmul.f32 %v410, %v357
        %v416 = vmul.f32 %v410, %v358
        %422 = vrot.lane.b32.xlu0 %v412, 126
        %v423 = vpop.permute.xlu0 %422
        %424 = vrot.lane.b32.xlu0 %v413, 126
        %v425 = vpop.permute.xlu0 %424
        %426 = vrot.lane.b32.xlu0 %v414, 126
        %v427 = vpop.permute.xlu0 %426
        %428 = vrot.lane.b32.xlu0 %v415, 126
        %v429 = vpop.permute.xlu0 %428
        %430 = vrot.lane.b32.xlu0 %v416, 126
        %v431 = vpop.permute.xlu0 %430
        %v432 = vsel %vm330, %v423, %v425
        %v433 = vsel %vm330, %v425, %v427
        %v434 = vsel %vm330, %v427, %v429
        %v435 = vsel %vm330, %v429, %v431
        %v440 = vadd.f32 %v404, %v432
        %v441 = vadd.f32 %v405, %v433
        %v442 = vadd.f32 %v406, %v434
        %v443 = vadd.f32 %v407, %v435
        %444 = vset.pattern.permute.xlu0 18
        %445 = vperm.xlu0 %444, %v246
        %v446 = vpop.permute.xlu0 %445
        %v448 = vadd.f32 %v440, %v446
        %v449 = vadd.f32 %v441, %v446
        %v450 = vadd.f32 %v442, %v446
        %v451 = vadd.f32 %v443, %v446
        %v452 = vmax.f32 %v448, 0.0
        %v453 = vmax.f32 %v449, 0.0
        %v454 = vmax.f32 %v450, 0.0
        %v455 = vmax.f32 %v451, 0.0
        %v456 = vadd.f32 %v452, %v453
        %v457 = vadd.f32 %v456, %v454
        %v458 = vadd.f32 %v457, %v455
        %459 = vadd.xlane.f32.xlu0 %v458
        %v460 = vpop.xlane.xlu0 %459
        %v461 = vadd.f32 %v460, 0.0
        %v462 = vld [vmem:[%s208 + $0x20] sm:$0xff]
        %v463 = vld [vmem:[%s208 + $0x28] sm:$0xff]
        %v464 = vld [vmem:[%s208 + $0x30] sm:$0xff]
        %v465 = vld [vmem:[%s208 + $0x38] sm:$0xff]
        %v466 = vmul.f32 %v255, %v462
        %v467 = vmul.f32 %v255, %v463
        %v468 = vmul.f32 %v255, %v464
        %v469 = vmul.f32 %v255, %v465
        %v470 = vadd.f32 %v466, 0.0
        %v471 = vadd.f32 %v467, 0.0
        %v472 = vadd.f32 %v468, 0.0
        %v473 = vadd.f32 %v469, 0.0
        %v474 = vmul.f32 %v269, %v462
        %v475 = vmul.f32 %v269, %v463
        %v476 = vmul.f32 %v269, %v464
        %v477 = vmul.f32 %v269, %v465
        %482 = vrot.lane.b32.xlu0 %v474, 127
        %v483 = vpop.permute.xlu0 %482
        %484 = vrot.lane.b32.xlu0 %v475, 127
        %v485 = vpop.permute.xlu0 %484
        %486 = vrot.lane.b32.xlu0 %v476, 127
        %v487 = vpop.permute.xlu0 %486
        %488 = vrot.lane.b32.xlu0 %v477, 127
        %v489 = vpop.permute.xlu0 %488
        %v490 = vsel %vm291, %v483, %v485
        %v491 = vsel %vm291, %v485, %v487
        %v492 = vsel %vm291, %v487, %v489
        %v497 = vadd.f32 %v470, %v490
        %v498 = vadd.f32 %v471, %v491
        %v499 = vadd.f32 %v472, %v492
        %v500 = vadd.f32 %v473, %v489
        %v501 = vmul.f32 %v308, %v462
        %v502 = vmul.f32 %v308, %v463
        %v503 = vmul.f32 %v308, %v464
        %v504 = vmul.f32 %v308, %v465
        %509 = vrot.lane.b32.xlu0 %v501, 126
        %v510 = vpop.permute.xlu0 %509
        %511 = vrot.lane.b32.xlu0 %v502, 126
        %v512 = vpop.permute.xlu0 %511
        %513 = vrot.lane.b32.xlu0 %v503, 126
        %v514 = vpop.permute.xlu0 %513
        %515 = vrot.lane.b32.xlu0 %v504, 126
        %v516 = vpop.permute.xlu0 %515
        %v517 = vsel %vm330, %v510, %v512
        %v518 = vsel %vm330, %v512, %v514
        %v519 = vsel %vm330, %v514, %v516
        %v524 = vadd.f32 %v497, %v517
        %v525 = vadd.f32 %v498, %v518
        %v526 = vadd.f32 %v499, %v519
        %v527 = vadd.f32 %v500, %v516
        %v528 = vadd.f32 %v524, %v347
        %v529 = vadd.f32 %v525, %v347
        %v530 = vadd.f32 %v526, %v347
        %v531 = vadd.f32 %v527, %v347
        %v532 = vmax.f32 %v528, 0.0
        %v533 = vmax.f32 %v529, 0.0
        %v534 = vmax.f32 %v530, 0.0
        %v535 = vmax.f32 %v531, 0.0
        %v536 = vmul.f32 %v362, %v532
        %v537 = vmul.f32 %v362, %v533
        %v538 = vmul.f32 %v362, %v534
        %v539 = vmul.f32 %v362, %v535
        %v540 = vadd.f32 %v536, 0.0
        %v541 = vadd.f32 %v537, 0.0
        %v542 = vadd.f32 %v538, 0.0
        %v543 = vadd.f32 %v539, 0.0
        %v544 = vmul.f32 %v374, %v532
        %v545 = vmul.f32 %v374, %v533
        %v546 = vmul.f32 %v374, %v534
        %v547 = vmul.f32 %v374, %v535
        %552 = vrot.lane.b32.xlu0 %v544, 127
        %v553 = vpop.permute.xlu0 %552
        %554 = vrot.lane.b32.xlu0 %v545, 127
        %v555 = vpop.permute.xlu0 %554
        %556 = vrot.lane.b32.xlu0 %v546, 127
        %v557 = vpop.permute.xlu0 %556
        %558 = vrot.lane.b32.xlu0 %v547, 127
        %v559 = vpop.permute.xlu0 %558
        %v560 = vsel %vm291, %v553, %v555
        %v561 = vsel %vm291, %v555, %v557
        %v562 = vsel %vm291, %v557, %v559
        %v567 = vadd.f32 %v540, %v560
        %v568 = vadd.f32 %v541, %v561
        %v569 = vadd.f32 %v542, %v562
        %v570 = vadd.f32 %v543, %v559
        %v571 = vmul.f32 %v410, %v532
        %v572 = vmul.f32 %v410, %v533
        %v573 = vmul.f32 %v410, %v534
        %v574 = vmul.f32 %v410, %v535
        %579 = vrot.lane.b32.xlu0 %v571, 126
        %v580 = vpop.permute.xlu0 %579
        %581 = vrot.lane.b32.xlu0 %v572, 126
        %v582 = vpop.permute.xlu0 %581
        %583 = vrot.lane.b32.xlu0 %v573, 126
        %v584 = vpop.permute.xlu0 %583
        %585 = vrot.lane.b32.xlu0 %v574, 126
        %v586 = vpop.permute.xlu0 %585
        %v587 = vsel %vm330, %v580, %v582
        %v588 = vsel %vm330, %v582, %v584
        %v589 = vsel %vm330, %v584, %v586
        %v594 = vadd.f32 %v567, %v587
        %v595 = vadd.f32 %v568, %v588
        %v596 = vadd.f32 %v569, %v589
        %v597 = vadd.f32 %v570, %v586
        %v598 = vadd.f32 %v594, %v446
        %v599 = vadd.f32 %v595, %v446
        %v600 = vadd.f32 %v596, %v446
        %v601 = vadd.f32 %v597, %v446
        %v602 = vmax.f32 %v598, 0.0
        %v603 = vmax.f32 %v599, 0.0
        %v604 = vmax.f32 %v600, 0.0
        %v605 = vmax.f32 %v601, 0.0
        %v606 = vadd.f32 %v602, %v603
        %v607 = vadd.f32 %v606, %v604
        %vm608 = vcmask 1014784
        %v609 = vsel %vm608, %v605, 0.0
        %v610 = vadd.f32 %v607, %v609
        %611 = vadd.xlane.f32.xlu0 %v610
        %v612 = vpop.xlane.xlu0 %611
        %v613 = vadd.f32 %v461, %v612
        %v614 = vmul.f32 %v613, 0.0009803922
        %615 = vset.pattern.permute.xlu0 3
        %616 = vperm.xlu0 %615, %v245
        %v617 = vpop.permute.xlu0 %616
        %v619 = vmul.f32 %v617, %v247
        %v620 = vmul.f32 %v617, %v248
        %v621 = vmul.f32 %v617, %v249
        %v622 = vmul.f32 %v617, %v250
        %v623 = vmul.f32 %v617, %v251
        %v624 = vadd.f32 %v619, 0.0
        %v625 = vadd.f32 %v620, 0.0
        %v626 = vadd.f32 %v621, 0.0
        %v627 = vadd.f32 %v622, 0.0
        %v628 = vadd.f32 %v623, 0.0
        %629 = vset.pattern.permute.xlu0 4
        %630 = vperm.xlu0 %629, %v245
        %v631 = vpop.permute.xlu0 %630
        %v633 = vmul.f32 %v631, %v247
        %v634 = vmul.f32 %v631, %v248
        %v635 = vmul.f32 %v631, %v249
        %v636 = vmul.f32 %v631, %v250
        %v637 = vmul.f32 %v631, %v251
        %643 = vrot.lane.b32.xlu0 %v633, 127
        %v644 = vpop.permute.xlu0 %643
        %645 = vrot.lane.b32.xlu0 %v634, 127
        %v646 = vpop.permute.xlu0 %645
        %647 = vrot.lane.b32.xlu0 %v635, 127
        %v648 = vpop.permute.xlu0 %647
        %649 = vrot.lane.b32.xlu0 %v636, 127
        %v650 = vpop.permute.xlu0 %649
        %651 = vrot.lane.b32.xlu0 %v637, 127
        %v652 = vpop.permute.xlu0 %651
        %v653 = vsel %vm291, %v644, %v646
        %v654 = vsel %vm291, %v646, %v648
        %v655 = vsel %vm291, %v648, %v650
        %v656 = vsel %vm291, %v650, %v652
        %v662 = vadd.f32 %v624, %v653
        %v663 = vadd.f32 %v625, %v654
        %v664 = vadd.f32 %v626, %v655
        %v665 = vadd.f32 %v627, %v656
        %v666 = vadd.f32 %v628, %v652
        %667 = vset.pattern.permute.xlu0 5
        %668 = vperm.xlu0 %667, %v245
        %v669 = vpop.permute.xlu0 %668
        %v671 = vmul.f32 %v669, %v247
        %v672 = vmul.f32 %v669, %v248
        %v673 = vmul.f32 %v669, %v249
        %v674 = vmul.f32 %v669, %v250
        %v675 = vmul.f32 %v669, %v251
        %681 = vrot.lane.b32.xlu0 %v671, 126
        %v682 = vpop.permute.xlu0 %681
        %683 = vrot.lane.b32.xlu0 %v672, 126
        %v684 = vpop.permute.xlu0 %683
        %685 = vrot.lane.b32.xlu0 %v673, 126
        %v686 = vpop.permute.xlu0 %685
        %687 = vrot.lane.b32.xlu0 %v674, 126
        %v688 = vpop.permute.xlu0 %687
        %689 = vrot.lane.b32.xlu0 %v675, 126
        %v690 = vpop.permute.xlu0 %689
        %v691 = vsel %vm330, %v682, %v684
        %v692 = vsel %vm330, %v684, %v686
        %v693 = vsel %vm330, %v686, %v688
        %v694 = vsel %vm330, %v688, %v690
        %v700 = vadd.f32 %v662, %v691
        %v701 = vadd.f32 %v663, %v692
        %v702 = vadd.f32 %v664, %v693
        %v703 = vadd.f32 %v665, %v694
        %v704 = vadd.f32 %v666, %v690
        %705 = vset.pattern.permute.xlu0 6
        %706 = vperm.xlu0 %705, %v245
        %v707 = vpop.permute.xlu0 %706
        %v709 = vmul.f32 %v707, %v247
        %v710 = vmul.f32 %v707, %v248
        %v711 = vmul.f32 %v707, %v249
        %v712 = vmul.f32 %v707, %v250
        %v713 = vmul.f32 %v707, %v251
        %719 = vrot.lane.b32.xlu0 %v709, 125
        %v720 = vpop.permute.xlu0 %719
        %721 = vrot.lane.b32.xlu0 %v710, 125
        %v722 = vpop.permute.xlu0 %721
        %723 = vrot.lane.b32.xlu0 %v711, 125
        %v724 = vpop.permute.xlu0 %723
        %725 = vrot.lane.b32.xlu0 %v712, 125
        %v726 = vpop.permute.xlu0 %725
        %727 = vrot.lane.b32.xlu0 %v713, 125
        %v728 = vpop.permute.xlu0 %727
        %vm729 = vcmask 1022976
        %v730 = vsel %vm729, %v720, %v722
        %v731 = vsel %vm729, %v722, %v724
        %v732 = vsel %vm729, %v724, %v726
        %v733 = vsel %vm729, %v726, %v728
        %v739 = vadd.f32 %v700, %v730
        %v740 = vadd.f32 %v701, %v731
        %v741 = vadd.f32 %v702, %v732
        %v742 = vadd.f32 %v703, %v733
        %v743 = vadd.f32 %v704, %v728
        %744 = vset.pattern.permute.xlu0 7
        %745 = vperm.xlu0 %744, %v245
        %v746 = vpop.permute.xlu0 %745
        %v748 = vmul.f32 %v746, %v247
        %v749 = vmul.f32 %v746, %v248
        %v750 = vmul.f32 %v746, %v249
        %v751 = vmul.f32 %v746, %v250
        %v752 = vmul.f32 %v746, %v251
        %758 = vrot.lane.b32.xlu0 %v748, 124
        %v759 = vpop.permute.xlu0 %758
        %760 = vrot.lane.b32.xlu0 %v749, 124
        %v761 = vpop.permute.xlu0 %760
        %762 = vrot.lane.b32.xlu0 %v750, 124
        %v763 = vpop.permute.xlu0 %762
        %764 = vrot.lane.b32.xlu0 %v751, 124
        %v765 = vpop.permute.xlu0 %764
        %766 = vrot.lane.b32.xlu0 %v752, 124
        %v767 = vpop.permute.xlu0 %766
        %v768 = vsel %vm608, %v759, %v761
        %v769 = vsel %vm608, %v761, %v763
        %v770 = vsel %vm608, %v763, %v765
        %v771 = vsel %vm608, %v765, %v767
        %v777 = vadd.f32 %v739, %v768
        %v778 = vadd.f32 %v740, %v769
        %v779 = vadd.f32 %v741, %v770
        %v780 = vadd.f32 %v742, %v771
        %v781 = vadd.f32 %v743, %v767
        %782 = vset.pattern.permute.xlu0 19
        %783 = vperm.xlu0 %782, %v245
        %v784 = vpop.permute.xlu0 %783
        %v786 = vadd.f32 %v777, %v784
        %v787 = vadd.f32 %v778, %v784
        %v788 = vadd.f32 %v779, %v784
        %v789 = vadd.f32 %v780, %v784
        %v790 = vadd.f32 %v781, %v784
        %v791 = vmax.f32 %v786, 0.0
        %v792 = vmax.f32 %v787, 0.0
        %v793 = vmax.f32 %v788, 0.0
        %v794 = vmax.f32 %v789, 0.0
        %v795 = vmax.f32 %v790, 0.0
        %796 = vset.pattern.permute.xlu0 3
        %797 = vperm.xlu0 %796, %v246
        %v798 = vpop.permute.xlu0 %797
        %v800 = vmul.f32 %v798, %v791
        %v801 = vmul.f32 %v798, %v792
        %v802 = vmul.f32 %v798, %v793
        %v803 = vmul.f32 %v798, %v794
        %v804 = vadd.f32 %v800, 0.0
        %v805 = vadd.f32 %v801, 0.0
        %v806 = vadd.f32 %v802, 0.0
        %v807 = vadd.f32 %v803, 0.0
        %808 = vset.pattern.permute.xlu0 4
        %809 = vperm.xlu0 %808, %v246
        %v810 = vpop.permute.xlu0 %809
        %v812 = vmul.f32 %v810, %v791
        %v813 = vmul.f32 %v810, %v792
        %v814 = vmul.f32 %v810, %v793
        %v815 = vmul.f32 %v810, %v794
        %v816 = vmul.f32 %v810, %v795
        %822 = vrot.lane.b32.xlu0 %v812, 127
        %v823 = vpop.permute.xlu0 %822
        %824 = vrot.lane.b32.xlu0 %v813, 127
        %v825 = vpop.permute.xlu0 %824
        %826 = vrot.lane.b32.xlu0 %v814, 127
        %v827 = vpop.permute.xlu0 %826
        %828 = vrot.lane.b32.xlu0 %v815, 127
        %v829 = vpop.permute.xlu0 %828
        %830 = vrot.lane.b32.xlu0 %v816, 127
        %v831 = vpop.permute.xlu0 %830
        %v832 = vsel %vm291, %v823, %v825
        %v833 = vsel %vm291, %v825, %v827
        %v834 = vsel %vm291, %v827, %v829
        %v835 = vsel %vm291, %v829, %v831
        %v840 = vadd.f32 %v804, %v832
        %v841 = vadd.f32 %v805, %v833
        %v842 = vadd.f32 %v806, %v834
        %v843 = vadd.f32 %v807, %v835
        %844 = vset.pattern.permute.xlu0 5
        %845 = vperm.xlu0 %844, %v246
        %v846 = vpop.permute.xlu0 %845
        %v848 = vmul.f32 %v846, %v791
        %v849 = vmul.f32 %v846, %v792
        %v850 = vmul.f32 %v846, %v793
        %v851 = vmul.f32 %v846, %v794
        %v852 = vmul.f32 %v846, %v795
        %858 = vrot.lane.b32.xlu0 %v848, 126
        %v859 = vpop.permute.xlu0 %858
        %860 = vrot.lane.b32.xlu0 %v849, 126
        %v861 = vpop.permute.xlu0 %860
        %862 = vrot.lane.b32.xlu0 %v850, 126
        %v863 = vpop.permute.xlu0 %862
        %864 = vrot.lane.b32.xlu0 %v851, 126
        %v865 = vpop.permute.xlu0 %864
        %866 = vrot.lane.b32.xlu0 %v852, 126
        %v867 = vpop.permute.xlu0 %866
        %v868 = vsel %vm330, %v859, %v861
        %v869 = vsel %vm330, %v861, %v863
        %v870 = vsel %vm330, %v863, %v865
        %v871 = vsel %vm330, %v865, %v867
        %v876 = vadd.f32 %v840, %v868
        %v877 = vadd.f32 %v841, %v869
        %v878 = vadd.f32 %v842, %v870
        %v879 = vadd.f32 %v843, %v871
        %880 = vset.pattern.permute.xlu0 6
        %881 = vperm.xlu0 %880, %v246
        %v882 = vpop.permute.xlu0 %881
        %v884 = vmul.f32 %v882, %v791
        %v885 = vmul.f32 %v882, %v792
        %v886 = vmul.f32 %v882, %v793
        %v887 = vmul.f32 %v882, %v794
        %v888 = vmul.f32 %v882, %v795
        %894 = vrot.lane.b32.xlu0 %v884, 125
        %v895 = vpop.permute.xlu0 %894
        %896 = vrot.lane.b32.xlu0 %v885, 125
        %v897 = vpop.permute.xlu0 %896
        %898 = vrot.lane.b32.xlu0 %v886, 125
        %v899 = vpop.permute.xlu0 %898
        %900 = vrot.lane.b32.xlu0 %v887, 125
        %v901 = vpop.permute.xlu0 %900
        %902 = vrot.lane.b32.xlu0 %v888, 125
        %v903 = vpop.permute.xlu0 %902
        %v904 = vsel %vm729, %v895, %v897
        %v905 = vsel %vm729, %v897, %v899
        %v906 = vsel %vm729, %v899, %v901
        %v907 = vsel %vm729, %v901, %v903
        %v912 = vadd.f32 %v876, %v904
        %v913 = vadd.f32 %v877, %v905
        %v914 = vadd.f32 %v878, %v906
        %v915 = vadd.f32 %v879, %v907
        %916 = vset.pattern.permute.xlu0 7
        %917 = vperm.xlu0 %916, %v246
        %v918 = vpop.permute.xlu0 %917
        %v920 = vmul.f32 %v918, %v791
        %v921 = vmul.f32 %v918, %v792
        %v922 = vmul.f32 %v918, %v793
        %v923 = vmul.f32 %v918, %v794
        %v924 = vmul.f32 %v918, %v795
        %930 = vrot.lane.b32.xlu0 %v920, 124
        %v931 = vpop.permute.xlu0 %930
        %932 = vrot.lane.b32.xlu0 %v921, 124
        %v933 = vpop.permute.xlu0 %932
        %934 = vrot.lane.b32.xlu0 %v922, 124
        %v935 = vpop.permute.xlu0 %934
        %936 = vrot.lane.b32.xlu0 %v923, 124
        %v937 = vpop.permute.xlu0 %936
        %938 = vrot.lane.b32.xlu0 %v924, 124
        %v939 = vpop.permute.xlu0 %938
        %v940 = vsel %vm608, %v931, %v933
        %v941 = vsel %vm608, %v933, %v935
        %v942 = vsel %vm608, %v935, %v937
        %v943 = vsel %vm608, %v937, %v939
        %v948 = vadd.f32 %v912, %v940
        %v949 = vadd.f32 %v913, %v941
        %v950 = vadd.f32 %v914, %v942
        %v951 = vadd.f32 %v915, %v943
        %952 = vset.pattern.permute.xlu0 19
        %953 = vperm.xlu0 %952, %v246
        %v954 = vpop.permute.xlu0 %953
        %v956 = vadd.f32 %v948, %v954
        %v957 = vadd.f32 %v949, %v954
        %v958 = vadd.f32 %v950, %v954
        %v959 = vadd.f32 %v951, %v954
        %v960 = vmax.f32 %v956, 0.0
        %v961 = vmax.f32 %v957, 0.0
        %v962 = vmax.f32 %v958, 0.0
        %v963 = vmax.f32 %v959, 0.0
        %v964 = vadd.f32 %v960, %v961
        %v965 = vadd.f32 %v964, %v962
        %v966 = vadd.f32 %v965, %v963
        %967 = vadd.xlane.f32.xlu0 %v966
        %v968 = vpop.xlane.xlu0 %967
        %v969 = vadd.f32 %v968, 0.0
        %v970 = vmul.f32 %v617, %v462
        %v971 = vmul.f32 %v617, %v463
        %v972 = vmul.f32 %v617, %v464
        %v973 = vmul.f32 %v617, %v465
        %v974 = vadd.f32 %v970, 0.0
        %v975 = vadd.f32 %v971, 0.0
        %v976 = vadd.f32 %v972, 0.0
        %v977 = vadd.f32 %v973, 0.0
        %v978 = vmul.f32 %v631, %v462
        %v979 = vmul.f32 %v631, %v463
        %v980 = vmul.f32 %v631, %v464
        %v981 = vmul.f32 %v631, %v465
        %986 = vrot.lane.b32.xlu0 %v978, 127
        %v987 = vpop.permute.xlu0 %986
        %988 = vrot.lane.b32.xlu0 %v979, 127
        %v989 = vpop.permute.xlu0 %988
        %990 = vrot.lane.b32.xlu0 %v980, 127
        %v991 = vpop.permute.xlu0 %990
        %992 = vrot.lane.b32.xlu0 %v981, 127
        %v993 = vpop.permute.xlu0 %992
        %v994 = vsel %vm291, %v987, %v989
        %v995 = vsel %vm291, %v989, %v991
        %v996 = vsel %vm291, %v991, %v993
        %v1001 = vadd.f32 %v974, %v994
        %v1002 = vadd.f32 %v975, %v995
        %v1003 = vadd.f32 %v976, %v996
        %v1004 = vadd.f32 %v977, %v993
        %v1005 = vmul.f32 %v669, %v462
        %v1006 = vmul.f32 %v669, %v463
        %v1007 = vmul.f32 %v669, %v464
        %v1008 = vmul.f32 %v669, %v465
        %1013 = vrot.lane.b32.xlu0 %v1005, 126
        %v1014 = vpop.permute.xlu0 %1013
        %1015 = vrot.lane.b32.xlu0 %v1006, 126
        %v1016 = vpop.permute.xlu0 %1015
        %1017 = vrot.lane.b32.xlu0 %v1007, 126
        %v1018 = vpop.permute.xlu0 %1017
        %1019 = vrot.lane.b32.xlu0 %v1008, 126
        %v1020 = vpop.permute.xlu0 %1019
        %v1021 = vsel %vm330, %v1014, %v1016
        %v1022 = vsel %vm330, %v1016, %v1018
        %v1023 = vsel %vm330, %v1018, %v1020
        %v1028 = vadd.f32 %v1001, %v1021
        %v1029 = vadd.f32 %v1002, %v1022
        %v1030 = vadd.f32 %v1003, %v1023
        %v1031 = vadd.f32 %v1004, %v1020
        %v1032 = vmul.f32 %v707, %v462
        %v1033 = vmul.f32 %v707, %v463
        %v1034 = vmul.f32 %v707, %v464
        %v1035 = vmul.f32 %v707, %v465
        %1040 = vrot.lane.b32.xlu0 %v1032, 125
        %v1041 = vpop.permute.xlu0 %1040
        %1042 = vrot.lane.b32.xlu0 %v1033, 125
        %v1043 = vpop.permute.xlu0 %1042
        %1044 = vrot.lane.b32.xlu0 %v1034, 125
        %v1045 = vpop.permute.xlu0 %1044
        %1046 = vrot.lane.b32.xlu0 %v1035, 125
        %v1047 = vpop.permute.xlu0 %1046
        %v1048 = vsel %vm729, %v1041, %v1043
        %v1049 = vsel %vm729, %v1043, %v1045
        %v1050 = vsel %vm729, %v1045, %v1047
        %v1055 = vadd.f32 %v1028, %v1048
        %v1056 = vadd.f32 %v1029, %v1049
        %v1057 = vadd.f32 %v1030, %v1050
        %v1058 = vadd.f32 %v1031, %v1047
        %v1059 = vmul.f32 %v746, %v462
        %v1060 = vmul.f32 %v746, %v463
        %v1061 = vmul.f32 %v746, %v464
        %v1062 = vmul.f32 %v746, %v465
        %1067 = vrot.lane.b32.xlu0 %v1059, 124
        %v1068 = vpop.permute.xlu0 %1067
        %1069 = vrot.lane.b32.xlu0 %v1060, 124
        %v1070 = vpop.permute.xlu0 %1069
        %1071 = vrot.lane.b32.xlu0 %v1061, 124
        %v1072 = vpop.permute.xlu0 %1071
        %1073 = vrot.lane.b32.xlu0 %v1062, 124
        %v1074 = vpop.permute.xlu0 %1073
        %v1075 = vsel %vm608, %v1068, %v1070
        %v1076 = vsel %vm608, %v1070, %v1072
        %v1077 = vsel %vm608, %v1072, %v1074
        %v1082 = vadd.f32 %v1055, %v1075
        %v1083 = vadd.f32 %v1056, %v1076
        %v1084 = vadd.f32 %v1057, %v1077
        %v1085 = vadd.f32 %v1058, %v1074
        %v1086 = vadd.f32 %v1082, %v784
        %v1087 = vadd.f32 %v1083, %v784
        %v1088 = vadd.f32 %v1084, %v784
        %v1089 = vadd.f32 %v1085, %v784
        %v1090 = vmax.f32 %v1086, 0.0
        %v1091 = vmax.f32 %v1087, 0.0
        %v1092 = vmax.f32 %v1088, 0.0
        %v1093 = vmax.f32 %v1089, 0.0
        %v1094 = vmul.f32 %v798, %v1090
        %v1095 = vmul.f32 %v798, %v1091
        %v1096 = vmul.f32 %v798, %v1092
        %v1097 = vmul.f32 %v798, %v1093
        %v1098 = vadd.f32 %v1094, 0.0
        %v1099 = vadd.f32 %v1095, 0.0
        %v1100 = vadd.f32 %v1096, 0.0
        %v1101 = vadd.f32 %v1097, 0.0
        %v1102 = vmul.f32 %v810, %v1090
        %v1103 = vmul.f32 %v810, %v1091
        %v1104 = vmul.f32 %v810, %v1092
        %v1105 = vmul.f32 %v810, %v1093
        %1110 = vrot.lane.b32.xlu0 %v1102, 127
        %v1111 = vpop.permute.xlu0 %1110
        %1112 = vrot.lane.b32.xlu0 %v1103, 127
        %v1113 = vpop.permute.xlu0 %1112
        %1114 = vrot.lane.b32.xlu0 %v1104, 127
        %v1115 = vpop.permute.xlu0 %1114
        %1116 = vrot.lane.b32.xlu0 %v1105, 127
        %v1117 = vpop.permute.xlu0 %1116
        %v1118 = vsel %vm291, %v1111, %v1113
        %v1119 = vsel %vm291, %v1113, %v1115
        %v1120 = vsel %vm291, %v1115, %v1117
        %v1125 = vadd.f32 %v1098, %v1118
        %v1126 = vadd.f32 %v1099, %v1119
        %v1127 = vadd.f32 %v1100, %v1120
        %v1128 = vadd.f32 %v1101, %v1117
        %v1129 = vmul.f32 %v846, %v1090
        %v1130 = vmul.f32 %v846, %v1091
        %v1131 = vmul.f32 %v846, %v1092
        %v1132 = vmul.f32 %v846, %v1093
        %1137 = vrot.lane.b32.xlu0 %v1129, 126
        %v1138 = vpop.permute.xlu0 %1137
        %1139 = vrot.lane.b32.xlu0 %v1130, 126
        %v1140 = vpop.permute.xlu0 %1139
        %1141 = vrot.lane.b32.xlu0 %v1131, 126
        %v1142 = vpop.permute.xlu0 %1141
        %1143 = vrot.lane.b32.xlu0 %v1132, 126
        %v1144 = vpop.permute.xlu0 %1143
        %v1145 = vsel %vm330, %v1138, %v1140
        %v1146 = vsel %vm330, %v1140, %v1142
        %v1147 = vsel %vm330, %v1142, %v1144
        %v1152 = vadd.f32 %v1125, %v1145
        %v1153 = vadd.f32 %v1126, %v1146
        %v1154 = vadd.f32 %v1127, %v1147
        %v1155 = vadd.f32 %v1128, %v1144
        %v1156 = vmul.f32 %v882, %v1090
        %v1157 = vmul.f32 %v882, %v1091
        %v1158 = vmul.f32 %v882, %v1092
        %v1159 = vmul.f32 %v882, %v1093
        %1164 = vrot.lane.b32.xlu0 %v1156, 125
        %v1165 = vpop.permute.xlu0 %1164
        %1166 = vrot.lane.b32.xlu0 %v1157, 125
        %v1167 = vpop.permute.xlu0 %1166
        %1168 = vrot.lane.b32.xlu0 %v1158, 125
        %v1169 = vpop.permute.xlu0 %1168
        %1170 = vrot.lane.b32.xlu0 %v1159, 125
        %v1171 = vpop.permute.xlu0 %1170
        %v1172 = vsel %vm729, %v1165, %v1167
        %v1173 = vsel %vm729, %v1167, %v1169
        %v1174 = vsel %vm729, %v1169, %v1171
        %v1179 = vadd.f32 %v1152, %v1172
        %v1180 = vadd.f32 %v1153, %v1173
        %v1181 = vadd.f32 %v1154, %v1174
        %v1182 = vadd.f32 %v1155, %v1171
        %v1183 = vmul.f32 %v918, %v1090
        %v1184 = vmul.f32 %v918, %v1091
        %v1185 = vmul.f32 %v918, %v1092
        %v1186 = vmul.f32 %v918, %v1093
        %1191 = vrot.lane.b32.xlu0 %v1183, 124
        %v1192 = vpop.permute.xlu0 %1191
        %1193 = vrot.lane.b32.xlu0 %v1184, 124
        %v1194 = vpop.permute.xlu0 %1193
        %1195 = vrot.lane.b32.xlu0 %v1185, 124
        %v1196 = vpop.permute.xlu0 %1195
        %1197 = vrot.lane.b32.xlu0 %v1186, 124
        %v1198 = vpop.permute.xlu0 %1197
        %v1199 = vsel %vm608, %v1192, %v1194
        %v1200 = vsel %vm608, %v1194, %v1196
        %v1201 = vsel %vm608, %v1196, %v1198
        %v1206 = vadd.f32 %v1179, %v1199
        %v1207 = vadd.f32 %v1180, %v1200
        %v1208 = vadd.f32 %v1181, %v1201
        %v1209 = vadd.f32 %v1182, %v1198
        %v1210 = vadd.f32 %v1206, %v954
        %v1211 = vadd.f32 %v1207, %v954
        %v1212 = vadd.f32 %v1208, %v954
        %v1213 = vadd.f32 %v1209, %v954
        %v1214 = vmax.f32 %v1210, 0.0
        %v1215 = vmax.f32 %v1211, 0.0
        %v1216 = vmax.f32 %v1212, 0.0
        %v1217 = vmax.f32 %v1213, 0.0
        %v1218 = vadd.f32 %v1214, %v1215
        %v1219 = vadd.f32 %v1218, %v1216
        %vm1220 = vcmask 982016
        %v1221 = vsel %vm1220, %v1217, 0.0
        %v1222 = vadd.f32 %v1219, %v1221
        %1223 = vadd.xlane.f32.xlu0 %v1222
        %v1224 = vpop.xlane.xlu0 %1223
        %v1225 = vadd.f32 %v969, %v1224
        %v1226 = vmul.f32 %v1225, 0.000984252
        %1227 = vset.pattern.permute.xlu0 8
        %1228 = vperm.xlu0 %1227, %v245
        %v1229 = vpop.permute.xlu0 %1228
        %v1231 = vmul.f32 %v1229, %v247
        %v1232 = vmul.f32 %v1229, %v248
        %v1233 = vmul.f32 %v1229, %v249
        %v1234 = vmul.f32 %v1229, %v250
        %v1235 = vmul.f32 %v1229, %v251
        %v1236 = vadd.f32 %v1231, 0.0
        %v1237 = vadd.f32 %v1232, 0.0
        %v1238 = vadd.f32 %v1233, 0.0
        %v1239 = vadd.f32 %v1234, 0.0
        %v1240 = vadd.f32 %v1235, 0.0
        %1241 = vset.pattern.permute.xlu0 9
        %1242 = vperm.xlu0 %1241, %v245
        %v1243 = vpop.permute.xlu0 %1242
        %v1245 = vmul.f32 %v1243, %v247
        %v1246 = vmul.f32 %v1243, %v248
        %v1247 = vmul.f32 %v1243, %v249
        %v1248 = vmul.f32 %v1243, %v250
        %v1249 = vmul.f32 %v1243, %v251
        %1255 = vrot.lane.b32.xlu0 %v1245, 127
        %v1256 = vpop.permute.xlu0 %1255
        %1257 = vrot.lane.b32.xlu0 %v1246, 127
        %v1258 = vpop.permute.xlu0 %1257
        %1259 = vrot.lane.b32.xlu0 %v1247, 127
        %v1260 = vpop.permute.xlu0 %1259
        %1261 = vrot.lane.b32.xlu0 %v1248, 127
        %v1262 = vpop.permute.xlu0 %1261
        %1263 = vrot.lane.b32.xlu0 %v1249, 127
        %v1264 = vpop.permute.xlu0 %1263
        %v1265 = vsel %vm291, %v1256, %v1258
        %v1266 = vsel %vm291, %v1258, %v1260
        %v1267 = vsel %vm291, %v1260, %v1262
        %v1268 = vsel %vm291, %v1262, %v1264
        %v1274 = vadd.f32 %v1236, %v1265
        %v1275 = vadd.f32 %v1237, %v1266
        %v1276 = vadd.f32 %v1238, %v1267
        %v1277 = vadd.f32 %v1239, %v1268
        %v1278 = vadd.f32 %v1240, %v1264
        %1279 = vset.pattern.permute.xlu0 10
        %1280 = vperm.xlu0 %1279, %v245
        %v1281 = vpop.permute.xlu0 %1280
        %v1283 = vmul.f32 %v1281, %v247
        %v1284 = vmul.f32 %v1281, %v248
        %v1285 = vmul.f32 %v1281, %v249
        %v1286 = vmul.f32 %v1281, %v250
        %v1287 = vmul.f32 %v1281, %v251
        %1293 = vrot.lane.b32.xlu0 %v1283, 126
        %v1294 = vpop.permute.xlu0 %1293
        %1295 = vrot.lane.b32.xlu0 %v1284, 126
        %v1296 = vpop.permute.xlu0 %1295
        %1297 = vrot.lane.b32.xlu0 %v1285, 126
        %v1298 = vpop.permute.xlu0 %1297
        %1299 = vrot.lane.b32.xlu0 %v1286, 126
        %v1300 = vpop.permute.xlu0 %1299
        %1301 = vrot.lane.b32.xlu0 %v1287, 126
        %v1302 = vpop.permute.xlu0 %1301
        %v1303 = vsel %vm330, %v1294, %v1296
        %v1304 = vsel %vm330, %v1296, %v1298
        %v1305 = vsel %vm330, %v1298, %v1300
        %v1306 = vsel %vm330, %v1300, %v1302
        %v1312 = vadd.f32 %v1274, %v1303
        %v1313 = vadd.f32 %v1275, %v1304
        %v1314 = vadd.f32 %v1276, %v1305
        %v1315 = vadd.f32 %v1277, %v1306
        %v1316 = vadd.f32 %v1278, %v1302
        %1317 = vset.pattern.permute.xlu0 11
        %1318 = vperm.xlu0 %1317, %v245
        %v1319 = vpop.permute.xlu0 %1318
        %v1321 = vmul.f32 %v1319, %v247
        %v1322 = vmul.f32 %v1319, %v248
        %v1323 = vmul.f32 %v1319, %v249
        %v1324 = vmul.f32 %v1319, %v250
        %v1325 = vmul.f32 %v1319, %v251
        %1331 = vrot.lane.b32.xlu0 %v1321, 125
        %v1332 = vpop.permute.xlu0 %1331
        %1333 = vrot.lane.b32.xlu0 %v1322, 125
        %v1334 = vpop.permute.xlu0 %1333
        %1335 = vrot.lane.b32.xlu0 %v1323, 125
        %v1336 = vpop.permute.xlu0 %1335
        %1337 = vrot.lane.b32.xlu0 %v1324, 125
        %v1338 = vpop.permute.xlu0 %1337
        %1339 = vrot.lane.b32.xlu0 %v1325, 125
        %v1340 = vpop.permute.xlu0 %1339
        %v1341 = vsel %vm729, %v1332, %v1334
        %v1342 = vsel %vm729, %v1334, %v1336
        %v1343 = vsel %vm729, %v1336, %v1338
        %v1344 = vsel %vm729, %v1338, %v1340
        %v1350 = vadd.f32 %v1312, %v1341
        %v1351 = vadd.f32 %v1313, %v1342
        %v1352 = vadd.f32 %v1314, %v1343
        %v1353 = vadd.f32 %v1315, %v1344
        %v1354 = vadd.f32 %v1316, %v1340
        %1355 = vset.pattern.permute.xlu0 12
        %1356 = vperm.xlu0 %1355, %v245
        %v1357 = vpop.permute.xlu0 %1356
        %v1359 = vmul.f32 %v1357, %v247
        %v1360 = vmul.f32 %v1357, %v248
        %v1361 = vmul.f32 %v1357, %v249
        %v1362 = vmul.f32 %v1357, %v250
        %v1363 = vmul.f32 %v1357, %v251
        %1369 = vrot.lane.b32.xlu0 %v1359, 124
        %v1370 = vpop.permute.xlu0 %1369
        %1371 = vrot.lane.b32.xlu0 %v1360, 124
        %v1372 = vpop.permute.xlu0 %1371
        %1373 = vrot.lane.b32.xlu0 %v1361, 124
        %v1374 = vpop.permute.xlu0 %1373
        %1375 = vrot.lane.b32.xlu0 %v1362, 124
        %v1376 = vpop.permute.xlu0 %1375
        %1377 = vrot.lane.b32.xlu0 %v1363, 124
        %v1378 = vpop.permute.xlu0 %1377
        %v1379 = vsel %vm608, %v1370, %v1372
        %v1380 = vsel %vm608, %v1372, %v1374
        %v1381 = vsel %vm608, %v1374, %v1376
        %v1382 = vsel %vm608, %v1376, %v1378
        %v1388 = vadd.f32 %v1350, %v1379
        %v1389 = vadd.f32 %v1351, %v1380
        %v1390 = vadd.f32 %v1352, %v1381
        %v1391 = vadd.f32 %v1353, %v1382
        %v1392 = vadd.f32 %v1354, %v1378
        %1393 = vset.pattern.permute.xlu0 13
        %1394 = vperm.xlu0 %1393, %v245
        %v1395 = vpop.permute.xlu0 %1394
        %v1397 = vmul.f32 %v1395, %v247
        %v1398 = vmul.f32 %v1395, %v248
        %v1399 = vmul.f32 %v1395, %v249
        %v1400 = vmul.f32 %v1395, %v250
        %v1401 = vmul.f32 %v1395, %v251
        %1407 = vrot.lane.b32.xlu0 %v1397, 123
        %v1408 = vpop.permute.xlu0 %1407
        %1409 = vrot.lane.b32.xlu0 %v1398, 123
        %v1410 = vpop.permute.xlu0 %1409
        %1411 = vrot.lane.b32.xlu0 %v1399, 123
        %v1412 = vpop.permute.xlu0 %1411
        %1413 = vrot.lane.b32.xlu0 %v1400, 123
        %v1414 = vpop.permute.xlu0 %1413
        %1415 = vrot.lane.b32.xlu0 %v1401, 123
        %v1416 = vpop.permute.xlu0 %1415
        %vm1417 = vcmask 1006592
        %v1418 = vsel %vm1417, %v1408, %v1410
        %v1419 = vsel %vm1417, %v1410, %v1412
        %v1420 = vsel %vm1417, %v1412, %v1414
        %v1421 = vsel %vm1417, %v1414, %v1416
        %v1427 = vadd.f32 %v1388, %v1418
        %v1428 = vadd.f32 %v1389, %v1419
        %v1429 = vadd.f32 %v1390, %v1420
        %v1430 = vadd.f32 %v1391, %v1421
        %v1431 = vadd.f32 %v1392, %v1416
        %1432 = vset.pattern.permute.xlu0 14
        %1433 = vperm.xlu0 %1432, %v245
        %v1434 = vpop.permute.xlu0 %1433
        %v1436 = vmul.f32 %v1434, %v247
        %v1437 = vmul.f32 %v1434, %v248
        %v1438 = vmul.f32 %v1434, %v249
        %v1439 = vmul.f32 %v1434, %v250
        %v1440 = vmul.f32 %v1434, %v251
        %1446 = vrot.lane.b32.xlu0 %v1436, 122
        %v1447 = vpop.permute.xlu0 %1446
        %1448 = vrot.lane.b32.xlu0 %v1437, 122
        %v1449 = vpop.permute.xlu0 %1448
        %1450 = vrot.lane.b32.xlu0 %v1438, 122
        %v1451 = vpop.permute.xlu0 %1450
        %1452 = vrot.lane.b32.xlu0 %v1439, 122
        %v1453 = vpop.permute.xlu0 %1452
        %1454 = vrot.lane.b32.xlu0 %v1440, 122
        %v1455 = vpop.permute.xlu0 %1454
        %vm1456 = vcmask 998400
        %v1457 = vsel %vm1456, %v1447, %v1449
        %v1458 = vsel %vm1456, %v1449, %v1451
        %v1459 = vsel %vm1456, %v1451, %v1453
        %v1460 = vsel %vm1456, %v1453, %v1455
        %v1466 = vadd.f32 %v1427, %v1457
        %v1467 = vadd.f32 %v1428, %v1458
        %v1468 = vadd.f32 %v1429, %v1459
        %v1469 = vadd.f32 %v1430, %v1460
        %v1470 = vadd.f32 %v1431, %v1455
        %1471 = vset.pattern.permute.xlu0 15
        %1472 = vperm.xlu0 %1471, %v245
        %v1473 = vpop.permute.xlu0 %1472
        %v1475 = vmul.f32 %v1473, %v247
        %v1476 = vmul.f32 %v1473, %v248
        %v1477 = vmul.f32 %v1473, %v249
        %v1478 = vmul.f32 %v1473, %v250
        %v1479 = vmul.f32 %v1473, %v251
        %1485 = vrot.lane.b32.xlu0 %v1475, 121
        %v1486 = vpop.permute.xlu0 %1485
        %1487 = vrot.lane.b32.xlu0 %v1476, 121
        %v1488 = vpop.permute.xlu0 %1487
        %1489 = vrot.lane.b32.xlu0 %v1477, 121
        %v1490 = vpop.permute.xlu0 %1489
        %1491 = vrot.lane.b32.xlu0 %v1478, 121
        %v1492 = vpop.permute.xlu0 %1491
        %1493 = vrot.lane.b32.xlu0 %v1479, 121
        %v1494 = vpop.permute.xlu0 %1493
        %vm1495 = vcmask 990208
        %v1496 = vsel %vm1495, %v1486, %v1488
        %v1497 = vsel %vm1495, %v1488, %v1490
        %v1498 = vsel %vm1495, %v1490, %v1492
        %v1499 = vsel %vm1495, %v1492, %v1494
        %v1505 = vadd.f32 %v1466, %v1496
        %v1506 = vadd.f32 %v1467, %v1497
        %v1507 = vadd.f32 %v1468, %v1498
        %v1508 = vadd.f32 %v1469, %v1499
        %v1509 = vadd.f32 %v1470, %v1494
        %1510 = vset.pattern.permute.xlu0 16
        %1511 = vperm.xlu0 %1510, %v245
        %v1512 = vpop.permute.xlu0 %1511
        %v1514 = vmul.f32 %v1512, %v247
        %v1515 = vmul.f32 %v1512, %v248
        %v1516 = vmul.f32 %v1512, %v249
        %v1517 = vmul.f32 %v1512, %v250
        %v1518 = vmul.f32 %v1512, %v251
        %1524 = vrot.lane.b32.xlu0 %v1514, 120
        %v1525 = vpop.permute.xlu0 %1524
        %1526 = vrot.lane.b32.xlu0 %v1515, 120
        %v1527 = vpop.permute.xlu0 %1526
        %1528 = vrot.lane.b32.xlu0 %v1516, 120
        %v1529 = vpop.permute.xlu0 %1528
        %1530 = vrot.lane.b32.xlu0 %v1517, 120
        %v1531 = vpop.permute.xlu0 %1530
        %1532 = vrot.lane.b32.xlu0 %v1518, 120
        %v1533 = vpop.permute.xlu0 %1532
        %v1534 = vsel %vm1220, %v1525, %v1527
        %v1535 = vsel %vm1220, %v1527, %v1529
        %v1536 = vsel %vm1220, %v1529, %v1531
        %v1537 = vsel %vm1220, %v1531, %v1533
        %v1543 = vadd.f32 %v1505, %v1534
        %v1544 = vadd.f32 %v1506, %v1535
        %v1545 = vadd.f32 %v1507, %v1536
        %v1546 = vadd.f32 %v1508, %v1537
        %v1547 = vadd.f32 %v1509, %v1533
        %1548 = vset.pattern.permute.xlu0 17
        %1549 = vperm.xlu0 %1548, %v245
        %v1550 = vpop.permute.xlu0 %1549
        %v1552 = vmul.f32 %v1550, %v247
        %v1553 = vmul.f32 %v1550, %v248
        %v1554 = vmul.f32 %v1550, %v249
        %v1555 = vmul.f32 %v1550, %v250
        %v1556 = vmul.f32 %v1550, %v251
        %1562 = vrot.lane.b32.xlu0 %v1552, 119
        %v1563 = vpop.permute.xlu0 %1562
        %1564 = vrot.lane.b32.xlu0 %v1553, 119
        %v1565 = vpop.permute.xlu0 %1564
        %1566 = vrot.lane.b32.xlu0 %v1554, 119
        %v1567 = vpop.permute.xlu0 %1566
        %1568 = vrot.lane.b32.xlu0 %v1555, 119
        %v1569 = vpop.permute.xlu0 %1568
        %1570 = vrot.lane.b32.xlu0 %v1556, 119
        %v1571 = vpop.permute.xlu0 %1570
        %vm1572 = vcmask 973824
        %v1573 = vsel %vm1572, %v1563, %v1565
        %v1574 = vsel %vm1572, %v1565, %v1567
        %v1575 = vsel %vm1572, %v1567, %v1569
        %v1576 = vsel %vm1572, %v1569, %v1571
        %v1582 = vadd.f32 %v1543, %v1573
        %v1583 = vadd.f32 %v1544, %v1574
        %v1584 = vadd.f32 %v1545, %v1575
        %v1585 = vadd.f32 %v1546, %v1576
        %v1586 = vadd.f32 %v1547, %v1571
        %1587 = vset.pattern.permute.xlu0 20
        %1588 = vperm.xlu0 %1587, %v245
        %v1589 = vpop.permute.xlu0 %1588
        %v1591 = vadd.f32 %v1582, %v1589
        %v1592 = vadd.f32 %v1583, %v1589
        %v1593 = vadd.f32 %v1584, %v1589
        %v1594 = vadd.f32 %v1585, %v1589
        %v1595 = vadd.f32 %v1586, %v1589
        %v1596 = vmax.f32 %v1591, 0.0
        %v1597 = vmax.f32 %v1592, 0.0
        %v1598 = vmax.f32 %v1593, 0.0
        %v1599 = vmax.f32 %v1594, 0.0
        %v1600 = vmax.f32 %v1595, 0.0
        %1601 = vset.pattern.permute.xlu0 8
        %1602 = vperm.xlu0 %1601, %v246
        %v1603 = vpop.permute.xlu0 %1602
        %v1605 = vmul.f32 %v1603, %v1596
        %v1606 = vmul.f32 %v1603, %v1597
        %v1607 = vmul.f32 %v1603, %v1598
        %v1608 = vmul.f32 %v1603, %v1599
        %v1609 = vadd.f32 %v1605, 0.0
        %v1610 = vadd.f32 %v1606, 0.0
        %v1611 = vadd.f32 %v1607, 0.0
        %v1612 = vadd.f32 %v1608, 0.0
        %1613 = vset.pattern.permute.xlu0 9
        %1614 = vperm.xlu0 %1613, %v246
        %v1615 = vpop.permute.xlu0 %1614
        %v1617 = vmul.f32 %v1615, %v1596
        %v1618 = vmul.f32 %v1615, %v1597
        %v1619 = vmul.f32 %v1615, %v1598
        %v1620 = vmul.f32 %v1615, %v1599
        %v1621 = vmul.f32 %v1615, %v1600
        %1627 = vrot.lane.b32.xlu0 %v1617, 127
        %v1628 = vpop.permute.xlu0 %1627
        %1629 = vrot.lane.b32.xlu0 %v1618, 127
        %v1630 = vpop.permute.xlu0 %1629
        %1631 = vrot.lane.b32.xlu0 %v1619, 127
        %v1632 = vpop.permute.xlu0 %1631
        %1633 = vrot.lane.b32.xlu0 %v1620, 127
        %v1634 = vpop.permute.xlu0 %1633
        %1635 = vrot.lane.b32.xlu0 %v1621, 127
        %v1636 = vpop.permute.xlu0 %1635
        %v1637 = vsel %vm291, %v1628, %v1630
        %v1638 = vsel %vm291, %v1630, %v1632
        %v1639 = vsel %vm291, %v1632, %v1634
        %v1640 = vsel %vm291, %v1634, %v1636
        %v1645 = vadd.f32 %v1609, %v1637
        %v1646 = vadd.f32 %v1610, %v1638
        %v1647 = vadd.f32 %v1611, %v1639
        %v1648 = vadd.f32 %v1612, %v1640
        %1649 = vset.pattern.permute.xlu0 10
        %1650 = vperm.xlu0 %1649, %v246
        %v1651 = vpop.permute.xlu0 %1650
        %v1653 = vmul.f32 %v1651, %v1596
        %v1654 = vmul.f32 %v1651, %v1597
        %v1655 = vmul.f32 %v1651, %v1598
        %v1656 = vmul.f32 %v1651, %v1599
        %v1657 = vmul.f32 %v1651, %v1600
        %1663 = vrot.lane.b32.xlu0 %v1653, 126
        %v1664 = vpop.permute.xlu0 %1663
        %1665 = vrot.lane.b32.xlu0 %v1654, 126
        %v1666 = vpop.permute.xlu0 %1665
        %1667 = vrot.lane.b32.xlu0 %v1655, 126
        %v1668 = vpop.permute.xlu0 %1667
        %1669 = vrot.lane.b32.xlu0 %v1656, 126
        %v1670 = vpop.permute.xlu0 %1669
        %1671 = vrot.lane.b32.xlu0 %v1657, 126
        %v1672 = vpop.permute.xlu0 %1671
        %v1673 = vsel %vm330, %v1664, %v1666
        %v1674 = vsel %vm330, %v1666, %v1668
        %v1675 = vsel %vm330, %v1668, %v1670
        %v1676 = vsel %vm330, %v1670, %v1672
        %v1681 = vadd.f32 %v1645, %v1673
        %v1682 = vadd.f32 %v1646, %v1674
        %v1683 = vadd.f32 %v1647, %v1675
        %v1684 = vadd.f32 %v1648, %v1676
        %1685 = vset.pattern.permute.xlu0 11
        %1686 = vperm.xlu0 %1685, %v246
        %v1687 = vpop.permute.xlu0 %1686
        %v1689 = vmul.f32 %v1687, %v1596
        %v1690 = vmul.f32 %v1687, %v1597
        %v1691 = vmul.f32 %v1687, %v1598
        %v1692 = vmul.f32 %v1687, %v1599
        %v1693 = vmul.f32 %v1687, %v1600
        %1699 = vrot.lane.b32.xlu0 %v1689, 125
        %v1700 = vpop.permute.xlu0 %1699
        %1701 = vrot.lane.b32.xlu0 %v1690, 125
        %v1702 = vpop.permute.xlu0 %1701
        %1703 = vrot.lane.b32.xlu0 %v1691, 125
        %v1704 = vpop.permute.xlu0 %1703
        %1705 = vrot.lane.b32.xlu0 %v1692, 125
        %v1706 = vpop.permute.xlu0 %1705
        %1707 = vrot.lane.b32.xlu0 %v1693, 125
        %v1708 = vpop.permute.xlu0 %1707
        %v1709 = vsel %vm729, %v1700, %v1702
        %v1710 = vsel %vm729, %v1702, %v1704
        %v1711 = vsel %vm729, %v1704, %v1706
        %v1712 = vsel %vm729, %v1706, %v1708
        %v1717 = vadd.f32 %v1681, %v1709
        %v1718 = vadd.f32 %v1682, %v1710
        %v1719 = vadd.f32 %v1683, %v1711
        %v1720 = vadd.f32 %v1684, %v1712
        %1721 = vset.pattern.permute.xlu0 12
        %1722 = vperm.xlu0 %1721, %v246
        %v1723 = vpop.permute.xlu0 %1722
        %v1725 = vmul.f32 %v1723, %v1596
        %v1726 = vmul.f32 %v1723, %v1597
        %v1727 = vmul.f32 %v1723, %v1598
        %v1728 = vmul.f32 %v1723, %v1599
        %v1729 = vmul.f32 %v1723, %v1600
        %1735 = vrot.lane.b32.xlu0 %v1725, 124
        %v1736 = vpop.permute.xlu0 %1735
        %1737 = vrot.lane.b32.xlu0 %v1726, 124
        %v1738 = vpop.permute.xlu0 %1737
        %1739 = vrot.lane.b32.xlu0 %v1727, 124
        %v1740 = vpop.permute.xlu0 %1739
        %1741 = vrot.lane.b32.xlu0 %v1728, 124
        %v1742 = vpop.permute.xlu0 %1741
        %1743 = vrot.lane.b32.xlu0 %v1729, 124
        %v1744 = vpop.permute.xlu0 %1743
        %v1745 = vsel %vm608, %v1736, %v1738
        %v1746 = vsel %vm608, %v1738, %v1740
        %v1747 = vsel %vm608, %v1740, %v1742
        %v1748 = vsel %vm608, %v1742, %v1744
        %v1753 = vadd.f32 %v1717, %v1745
        %v1754 = vadd.f32 %v1718, %v1746
        %v1755 = vadd.f32 %v1719, %v1747
        %v1756 = vadd.f32 %v1720, %v1748
        %1757 = vset.pattern.permute.xlu0 13
        %1758 = vperm.xlu0 %1757, %v246
        %v1759 = vpop.permute.xlu0 %1758
        %v1761 = vmul.f32 %v1759, %v1596
        %v1762 = vmul.f32 %v1759, %v1597
        %v1763 = vmul.f32 %v1759, %v1598
        %v1764 = vmul.f32 %v1759, %v1599
        %v1765 = vmul.f32 %v1759, %v1600
        %1771 = vrot.lane.b32.xlu0 %v1761, 123
        %v1772 = vpop.permute.xlu0 %1771
        %1773 = vrot.lane.b32.xlu0 %v1762, 123
        %v1774 = vpop.permute.xlu0 %1773
        %1775 = vrot.lane.b32.xlu0 %v1763, 123
        %v1776 = vpop.permute.xlu0 %1775
        %1777 = vrot.lane.b32.xlu0 %v1764, 123
        %v1778 = vpop.permute.xlu0 %1777
        %1779 = vrot.lane.b32.xlu0 %v1765, 123
        %v1780 = vpop.permute.xlu0 %1779
        %v1781 = vsel %vm1417, %v1772, %v1774
        %v1782 = vsel %vm1417, %v1774, %v1776
        %v1783 = vsel %vm1417, %v1776, %v1778
        %v1784 = vsel %vm1417, %v1778, %v1780
        %v1789 = vadd.f32 %v1753, %v1781
        %v1790 = vadd.f32 %v1754, %v1782
        %v1791 = vadd.f32 %v1755, %v1783
        %v1792 = vadd.f32 %v1756, %v1784
        %1793 = vset.pattern.permute.xlu0 14
        %1794 = vperm.xlu0 %1793, %v246
        %v1795 = vpop.permute.xlu0 %1794
        %v1797 = vmul.f32 %v1795, %v1596
        %v1798 = vmul.f32 %v1795, %v1597
        %v1799 = vmul.f32 %v1795, %v1598
        %v1800 = vmul.f32 %v1795, %v1599
        %v1801 = vmul.f32 %v1795, %v1600
        %1807 = vrot.lane.b32.xlu0 %v1797, 122
        %v1808 = vpop.permute.xlu0 %1807
        %1809 = vrot.lane.b32.xlu0 %v1798, 122
        %v1810 = vpop.permute.xlu0 %1809
        %1811 = vrot.lane.b32.xlu0 %v1799, 122
        %v1812 = vpop.permute.xlu0 %1811
        %1813 = vrot.lane.b32.xlu0 %v1800, 122
        %v1814 = vpop.permute.xlu0 %1813
        %1815 = vrot.lane.b32.xlu0 %v1801, 122
        %v1816 = vpop.permute.xlu0 %1815
        %v1817 = vsel %vm1456, %v1808, %v1810
        %v1818 = vsel %vm1456, %v1810, %v1812
        %v1819 = vsel %vm1456, %v1812, %v1814
        %v1820 = vsel %vm1456, %v1814, %v1816
        %v1825 = vadd.f32 %v1789, %v1817
        %v1826 = vadd.f32 %v1790, %v1818
        %v1827 = vadd.f32 %v1791, %v1819
        %v1828 = vadd.f32 %v1792, %v1820
        %1829 = vset.pattern.permute.xlu0 15
        %1830 = vperm.xlu0 %1829, %v246
        %v1831 = vpop.permute.xlu0 %1830
        %v1833 = vmul.f32 %v1831, %v1596
        %v1834 = vmul.f32 %v1831, %v1597
        %v1835 = vmul.f32 %v1831, %v1598
        %v1836 = vmul.f32 %v1831, %v1599
        %v1837 = vmul.f32 %v1831, %v1600
        %1843 = vrot.lane.b32.xlu0 %v1833, 121
        %v1844 = vpop.permute.xlu0 %1843
        %1845 = vrot.lane.b32.xlu0 %v1834, 121
        %v1846 = vpop.permute.xlu0 %1845
        %1847 = vrot.lane.b32.xlu0 %v1835, 121
        %v1848 = vpop.permute.xlu0 %1847
        %1849 = vrot.lane.b32.xlu0 %v1836, 121
        %v1850 = vpop.permute.xlu0 %1849
        %1851 = vrot.lane.b32.xlu0 %v1837, 121
        %v1852 = vpop.permute.xlu0 %1851
        %v1853 = vsel %vm1495, %v1844, %v1846
        %v1854 = vsel %vm1495, %v1846, %v1848
        %v1855 = vsel %vm1495, %v1848, %v1850
        %v1856 = vsel %vm1495, %v1850, %v1852
        %v1861 = vadd.f32 %v1825, %v1853
        %v1862 = vadd.f32 %v1826, %v1854
        %v1863 = vadd.f32 %v1827, %v1855
        %v1864 = vadd.f32 %v1828, %v1856
        %1865 = vset.pattern.permute.xlu0 16
        %1866 = vperm.xlu0 %1865, %v246
        %v1867 = vpop.permute.xlu0 %1866
        %v1869 = vmul.f32 %v1867, %v1596
        %v1870 = vmul.f32 %v1867, %v1597
        %v1871 = vmul.f32 %v1867, %v1598
        %v1872 = vmul.f32 %v1867, %v1599
        %v1873 = vmul.f32 %v1867, %v1600
        %1879 = vrot.lane.b32.xlu0 %v1869, 120
        %v1880 = vpop.permute.xlu0 %1879
        %1881 = vrot.lane.b32.xlu0 %v1870, 120
        %v1882 = vpop.permute.xlu0 %1881
        %1883 = vrot.lane.b32.xlu0 %v1871, 120
        %v1884 = vpop.permute.xlu0 %1883
        %1885 = vrot.lane.b32.xlu0 %v1872, 120
        %v1886 = vpop.permute.xlu0 %1885
        %1887 = vrot.lane.b32.xlu0 %v1873, 120
        %v1888 = vpop.permute.xlu0 %1887
        %v1889 = vsel %vm1220, %v1880, %v1882
        %v1890 = vsel %vm1220, %v1882, %v1884
        %v1891 = vsel %vm1220, %v1884, %v1886
        %v1892 = vsel %vm1220, %v1886, %v1888
        %v1897 = vadd.f32 %v1861, %v1889
        %v1898 = vadd.f32 %v1862, %v1890
        %v1899 = vadd.f32 %v1863, %v1891
        %v1900 = vadd.f32 %v1864, %v1892
        %1901 = vset.pattern.permute.xlu0 17
        %1902 = vperm.xlu0 %1901, %v246
        %v1903 = vpop.permute.xlu0 %1902
        %v1905 = vmul.f32 %v1903, %v1596
        %v1906 = vmul.f32 %v1903, %v1597
        %v1907 = vmul.f32 %v1903, %v1598
        %v1908 = vmul.f32 %v1903, %v1599
        %v1909 = vmul.f32 %v1903, %v1600
        %1915 = vrot.lane.b32.xlu0 %v1905, 119
        %v1916 = vpop.permute.xlu0 %1915
        %1917 = vrot.lane.b32.xlu0 %v1906, 119
        %v1918 = vpop.permute.xlu0 %1917
        %1919 = vrot.lane.b32.xlu0 %v1907, 119
        %v1920 = vpop.permute.xlu0 %1919
        %1921 = vrot.lane.b32.xlu0 %v1908, 119
        %v1922 = vpop.permute.xlu0 %1921
        %1923 = vrot.lane.b32.xlu0 %v1909, 119
        %v1924 = vpop.permute.xlu0 %1923
        %v1925 = vsel %vm1572, %v1916, %v1918
        %v1926 = vsel %vm1572, %v1918, %v1920
        %v1927 = vsel %vm1572, %v1920, %v1922
        %v1928 = vsel %vm1572, %v1922, %v1924
        %v1933 = vadd.f32 %v1897, %v1925
        %v1934 = vadd.f32 %v1898, %v1926
        %v1935 = vadd.f32 %v1899, %v1927
        %v1936 = vadd.f32 %v1900, %v1928
        %1937 = vset.pattern.permute.xlu0 20
        %1938 = vperm.xlu0 %1937, %v246
        %v1939 = vpop.permute.xlu0 %1938
        %v1941 = vadd.f32 %v1933, %v1939
        %v1942 = vadd.f32 %v1934, %v1939
        %v1943 = vadd.f32 %v1935, %v1939
        %v1944 = vadd.f32 %v1936, %v1939
        %v1945 = vmax.f32 %v1941, 0.0
        %v1946 = vmax.f32 %v1942, 0.0
        %v1947 = vmax.f32 %v1943, 0.0
        %v1948 = vmax.f32 %v1944, 0.0
        %v1949 = vadd.f32 %v1945, %v1946
        %v1950 = vadd.f32 %v1949, %v1947
        %v1951 = vadd.f32 %v1950, %v1948
        %1952 = vadd.xlane.f32.xlu0 %v1951
        %v1953 = vpop.xlane.xlu0 %1952
        %v1954 = vadd.f32 %v1953, 0.0
        %v1955 = vmul.f32 %v1229, %v462
        %v1956 = vmul.f32 %v1229, %v463
        %v1957 = vmul.f32 %v1229, %v464
        %v1958 = vmul.f32 %v1229, %v465
        %v1959 = vadd.f32 %v1955, 0.0
        %v1960 = vadd.f32 %v1956, 0.0
        %v1961 = vadd.f32 %v1957, 0.0
        %v1962 = vadd.f32 %v1958, 0.0
        %v1963 = vmul.f32 %v1243, %v462
        %v1964 = vmul.f32 %v1243, %v463
        %v1965 = vmul.f32 %v1243, %v464
        %v1966 = vmul.f32 %v1243, %v465
        %1971 = vrot.lane.b32.xlu0 %v1963, 127
        %v1972 = vpop.permute.xlu0 %1971
        %1973 = vrot.lane.b32.xlu0 %v1964, 127
        %v1974 = vpop.permute.xlu0 %1973
        %1975 = vrot.lane.b32.xlu0 %v1965, 127
        %v1976 = vpop.permute.xlu0 %1975
        %1977 = vrot.lane.b32.xlu0 %v1966, 127
        %v1978 = vpop.permute.xlu0 %1977
        %v1979 = vsel %vm291, %v1972, %v1974
        %v1980 = vsel %vm291, %v1974, %v1976
        %v1981 = vsel %vm291, %v1976, %v1978
        %v1986 = vadd.f32 %v1959, %v1979
        %v1987 = vadd.f32 %v1960, %v1980
        %v1988 = vadd.f32 %v1961, %v1981
        %v1989 = vadd.f32 %v1962, %v1978
        %v1990 = vmul.f32 %v1281, %v462
        %v1991 = vmul.f32 %v1281, %v463
        %v1992 = vmul.f32 %v1281, %v464
        %v1993 = vmul.f32 %v1281, %v465
        %1998 = vrot.lane.b32.xlu0 %v1990, 126
        %v1999 = vpop.permute.xlu0 %1998
        %2000 = vrot.lane.b32.xlu0 %v1991, 126
        %v2001 = vpop.permute.xlu0 %2000
        %2002 = vrot.lane.b32.xlu0 %v1992, 126
        %v2003 = vpop.permute.xlu0 %2002
        %2004 = vrot.lane.b32.xlu0 %v1993, 126
        %v2005 = vpop.permute.xlu0 %2004
        %v2006 = vsel %vm330, %v1999, %v2001
        %v2007 = vsel %vm330, %v2001, %v2003
        %v2008 = vsel %vm330, %v2003, %v2005
        %v2013 = vadd.f32 %v1986, %v2006
        %v2014 = vadd.f32 %v1987, %v2007
        %v2015 = vadd.f32 %v1988, %v2008
        %v2016 = vadd.f32 %v1989, %v2005
        %v2017 = vmul.f32 %v1319, %v462
        %v2018 = vmul.f32 %v1319, %v463
        %v2019 = vmul.f32 %v1319, %v464
        %v2020 = vmul.f32 %v1319, %v465
        %2025 = vrot.lane.b32.xlu0 %v2017, 125
        %v2026 = vpop.permute.xlu0 %2025
        %2027 = vrot.lane.b32.xlu0 %v2018, 125
        %v2028 = vpop.permute.xlu0 %2027
        %2029 = vrot.lane.b32.xlu0 %v2019, 125
        %v2030 = vpop.permute.xlu0 %2029
        %2031 = vrot.lane.b32.xlu0 %v2020, 125
        %v2032 = vpop.permute.xlu0 %2031
        %v2033 = vsel %vm729, %v2026, %v2028
        %v2034 = vsel %vm729, %v2028, %v2030
        %v2035 = vsel %vm729, %v2030, %v2032
        %v2040 = vadd.f32 %v2013, %v2033
        %v2041 = vadd.f32 %v2014, %v2034
        %v2042 = vadd.f32 %v2015, %v2035
        %v2043 = vadd.f32 %v2016, %v2032
        %v2044 = vmul.f32 %v1357, %v462
        %v2045 = vmul.f32 %v1357, %v463
        %v2046 = vmul.f32 %v1357, %v464
        %v2047 = vmul.f32 %v1357, %v465
        %2052 = vrot.lane.b32.xlu0 %v2044, 124
        %v2053 = vpop.permute.xlu0 %2052
        %2054 = vrot.lane.b32.xlu0 %v2045, 124
        %v2055 = vpop.permute.xlu0 %2054
        %2056 = vrot.lane.b32.xlu0 %v2046, 124
        %v2057 = vpop.permute.xlu0 %2056
        %2058 = vrot.lane.b32.xlu0 %v2047, 124
        %v2059 = vpop.permute.xlu0 %2058
        %v2060 = vsel %vm608, %v2053, %v2055
        %v2061 = vsel %vm608, %v2055, %v2057
        %v2062 = vsel %vm608, %v2057, %v2059
        %v2067 = vadd.f32 %v2040, %v2060
        %v2068 = vadd.f32 %v2041, %v2061
        %v2069 = vadd.f32 %v2042, %v2062
        %v2070 = vadd.f32 %v2043, %v2059
        %v2071 = vmul.f32 %v1395, %v462
        %v2072 = vmul.f32 %v1395, %v463
        %v2073 = vmul.f32 %v1395, %v464
        %v2074 = vmul.f32 %v1395, %v465
        %2079 = vrot.lane.b32.xlu0 %v2071, 123
        %v2080 = vpop.permute.xlu0 %2079
        %2081 = vrot.lane.b32.xlu0 %v2072, 123
        %v2082 = vpop.permute.xlu0 %2081
        %2083 = vrot.lane.b32.xlu0 %v2073, 123
        %v2084 = vpop.permute.xlu0 %2083
        %2085 = vrot.lane.b32.xlu0 %v2074, 123
        %v2086 = vpop.permute.xlu0 %2085
        %v2087 = vsel %vm1417, %v2080, %v2082
        %v2088 = vsel %vm1417, %v2082, %v2084
        %v2089 = vsel %vm1417, %v2084, %v2086
        %v2094 = vadd.f32 %v2067, %v2087
        %v2095 = vadd.f32 %v2068, %v2088
        %v2096 = vadd.f32 %v2069, %v2089
        %v2097 = vadd.f32 %v2070, %v2086
        %v2098 = vmul.f32 %v1434, %v462
        %v2099 = vmul.f32 %v1434, %v463
        %v2100 = vmul.f32 %v1434, %v464
        %v2101 = vmul.f32 %v1434, %v465
        %2106 = vrot.lane.b32.xlu0 %v2098, 122
        %v2107 = vpop.permute.xlu0 %2106
        %2108 = vrot.lane.b32.xlu0 %v2099, 122
        %v2109 = vpop.permute.xlu0 %2108
        %2110 = vrot.lane.b32.xlu0 %v2100, 122
        %v2111 = vpop.permute.xlu0 %2110
        %2112 = vrot.lane.b32.xlu0 %v2101, 122
        %v2113 = vpop.permute.xlu0 %2112
        %v2114 = vsel %vm1456, %v2107, %v2109
        %v2115 = vsel %vm1456, %v2109, %v2111
        %v2116 = vsel %vm1456, %v2111, %v2113
        %v2121 = vadd.f32 %v2094, %v2114
        %v2122 = vadd.f32 %v2095, %v2115
        %v2123 = vadd.f32 %v2096, %v2116
        %v2124 = vadd.f32 %v2097, %v2113
        %v2125 = vmul.f32 %v1473, %v462
        %v2126 = vmul.f32 %v1473, %v463
        %v2127 = vmul.f32 %v1473, %v464
        %v2128 = vmul.f32 %v1473, %v465
        %2133 = vrot.lane.b32.xlu0 %v2125, 121
        %v2134 = vpop.permute.xlu0 %2133
        %2135 = vrot.lane.b32.xlu0 %v2126, 121
        %v2136 = vpop.permute.xlu0 %2135
        %2137 = vrot.lane.b32.xlu0 %v2127, 121
        %v2138 = vpop.permute.xlu0 %2137
        %2139 = vrot.lane.b32.xlu0 %v2128, 121
        %v2140 = vpop.permute.xlu0 %2139
        %v2141 = vsel %vm1495, %v2134, %v2136
        %v2142 = vsel %vm1495, %v2136, %v2138
        %v2143 = vsel %vm1495, %v2138, %v2140
        %v2148 = vadd.f32 %v2121, %v2141
        %v2149 = vadd.f32 %v2122, %v2142
        %v2150 = vadd.f32 %v2123, %v2143
        %v2151 = vadd.f32 %v2124, %v2140
        %v2152 = vmul.f32 %v1512, %v462
        %v2153 = vmul.f32 %v1512, %v463
        %v2154 = vmul.f32 %v1512, %v464
        %v2155 = vmul.f32 %v1512, %v465
        %2160 = vrot.lane.b32.xlu0 %v2152, 120
        %v2161 = vpop.permute.xlu0 %2160
        %2162 = vrot.lane.b32.xlu0 %v2153, 120
        %v2163 = vpop.permute.xlu0 %2162
        %2164 = vrot.lane.b32.xlu0 %v2154, 120
        %v2165 = vpop.permute.xlu0 %2164
        %2166 = vrot.lane.b32.xlu0 %v2155, 120
        %v2167 = vpop.permute.xlu0 %2166
        %v2168 = vsel %vm1220, %v2161, %v2163
        %v2169 = vsel %vm1220, %v2163, %v2165
        %v2170 = vsel %vm1220, %v2165, %v2167
        %v2175 = vadd.f32 %v2148, %v2168
        %v2176 = vadd.f32 %v2149, %v2169
        %v2177 = vadd.f32 %v2150, %v2170
        %v2178 = vadd.f32 %v2151, %v2167
        %v2179 = vmul.f32 %v1550, %v462
        %v2180 = vmul.f32 %v1550, %v463
        %v2181 = vmul.f32 %v1550, %v464
        %v2182 = vmul.f32 %v1550, %v465
        %2187 = vrot.lane.b32.xlu0 %v2179, 119
        %v2188 = vpop.permute.xlu0 %2187
        %2189 = vrot.lane.b32.xlu0 %v2180, 119
        %v2190 = vpop.permute.xlu0 %2189
        %2191 = vrot.lane.b32.xlu0 %v2181, 119
        %v2192 = vpop.permute.xlu0 %2191
        %2193 = vrot.lane.b32.xlu0 %v2182, 119
        %v2194 = vpop.permute.xlu0 %2193
        %v2195 = vsel %vm1572, %v2188, %v2190
        %v2196 = vsel %vm1572, %v2190, %v2192
        %v2197 = vsel %vm1572, %v2192, %v2194
        %v2202 = vadd.f32 %v2175, %v2195
        %v2203 = vadd.f32 %v2176, %v2196
        %v2204 = vadd.f32 %v2177, %v2197
        %v2205 = vadd.f32 %v2178, %v2194
        %v2206 = vadd.f32 %v2202, %v1589
        %v2207 = vadd.f32 %v2203, %v1589
        %v2208 = vadd.f32 %v2204, %v1589
        %v2209 = vadd.f32 %v2205, %v1589
        %v2210 = vmax.f32 %v2206, 0.0
        %v2211 = vmax.f32 %v2207, 0.0
        %v2212 = vmax.f32 %v2208, 0.0
        %v2213 = vmax.f32 %v2209, 0.0
        %v2214 = vmul.f32 %v1603, %v2210
        %v2215 = vmul.f32 %v1603, %v2211
        %v2216 = vmul.f32 %v1603, %v2212
        %v2217 = vmul.f32 %v1603, %v2213
        %v2218 = vadd.f32 %v2214, 0.0
        %v2219 = vadd.f32 %v2215, 0.0
        %v2220 = vadd.f32 %v2216, 0.0
        %v2221 = vadd.f32 %v2217, 0.0
        %v2222 = vmul.f32 %v1615, %v2210
        %v2223 = vmul.f32 %v1615, %v2211
        %v2224 = vmul.f32 %v1615, %v2212
        %v2225 = vmul.f32 %v1615, %v2213
        %2230 = vrot.lane.b32.xlu0 %v2222, 127
        %v2231 = vpop.permute.xlu0 %2230
        %2232 = vrot.lane.b32.xlu0 %v2223, 127
        %v2233 = vpop.permute.xlu0 %2232
        %2234 = vrot.lane.b32.xlu0 %v2224, 127
        %v2235 = vpop.permute.xlu0 %2234
        %2236 = vrot.lane.b32.xlu0 %v2225, 127
        %v2237 = vpop.permute.xlu0 %2236
        %v2238 = vsel %vm291, %v2231, %v2233
        %v2239 = vsel %vm291, %v2233, %v2235
        %v2240 = vsel %vm291, %v2235, %v2237
        %v2245 = vadd.f32 %v2218, %v2238
        %v2246 = vadd.f32 %v2219, %v2239
        %v2247 = vadd.f32 %v2220, %v2240
        %v2248 = vadd.f32 %v2221, %v2237
        %v2249 = vmul.f32 %v1651, %v2210
        %v2250 = vmul.f32 %v1651, %v2211
        %v2251 = vmul.f32 %v1651, %v2212
        %v2252 = vmul.f32 %v1651, %v2213
        %2257 = vrot.lane.b32.xlu0 %v2249, 126
        %v2258 = vpop.permute.xlu0 %2257
        %2259 = vrot.lane.b32.xlu0 %v2250, 126
        %v2260 = vpop.permute.xlu0 %2259
        %2261 = vrot.lane.b32.xlu0 %v2251, 126
        %v2262 = vpop.permute.xlu0 %2261
        %2263 = vrot.lane.b32.xlu0 %v2252, 126
        %v2264 = vpop.permute.xlu0 %2263
        %v2265 = vsel %vm330, %v2258, %v2260
        %v2266 = vsel %vm330, %v2260, %v2262
        %v2267 = vsel %vm330, %v2262, %v2264
        %v2272 = vadd.f32 %v2245, %v2265
        %v2273 = vadd.f32 %v2246, %v2266
        %v2274 = vadd.f32 %v2247, %v2267
        %v2275 = vadd.f32 %v2248, %v2264
        %v2276 = vmul.f32 %v1687, %v2210
        %v2277 = vmul.f32 %v1687, %v2211
        %v2278 = vmul.f32 %v1687, %v2212
        %v2279 = vmul.f32 %v1687, %v2213
        %2284 = vrot.lane.b32.xlu0 %v2276, 125
        %v2285 = vpop.permute.xlu0 %2284
        %2286 = vrot.lane.b32.xlu0 %v2277, 125
        %v2287 = vpop.permute.xlu0 %2286
        %2288 = vrot.lane.b32.xlu0 %v2278, 125
        %v2289 = vpop.permute.xlu0 %2288
        %2290 = vrot.lane.b32.xlu0 %v2279, 125
        %v2291 = vpop.permute.xlu0 %2290
        %v2292 = vsel %vm729, %v2285, %v2287
        %v2293 = vsel %vm729, %v2287, %v2289
        %v2294 = vsel %vm729, %v2289, %v2291
        %v2299 = vadd.f32 %v2272, %v2292
        %v2300 = vadd.f32 %v2273, %v2293
        %v2301 = vadd.f32 %v2274, %v2294
        %v2302 = vadd.f32 %v2275, %v2291
        %v2303 = vmul.f32 %v1723, %v2210
        %v2304 = vmul.f32 %v1723, %v2211
        %v2305 = vmul.f32 %v1723, %v2212
        %v2306 = vmul.f32 %v1723, %v2213
        %2311 = vrot.lane.b32.xlu0 %v2303, 124
        %v2312 = vpop.permute.xlu0 %2311
        %2313 = vrot.lane.b32.xlu0 %v2304, 124
        %v2314 = vpop.permute.xlu0 %2313
        %2315 = vrot.lane.b32.xlu0 %v2305, 124
        %v2316 = vpop.permute.xlu0 %2315
        %2317 = vrot.lane.b32.xlu0 %v2306, 124
        %v2318 = vpop.permute.xlu0 %2317
        %v2319 = vsel %vm608, %v2312, %v2314
        %v2320 = vsel %vm608, %v2314, %v2316
        %v2321 = vsel %vm608, %v2316, %v2318
        %v2326 = vadd.f32 %v2299, %v2319
        %v2327 = vadd.f32 %v2300, %v2320
        %v2328 = vadd.f32 %v2301, %v2321
        %v2329 = vadd.f32 %v2302, %v2318
        %v2330 = vmul.f32 %v1759, %v2210
        %v2331 = vmul.f32 %v1759, %v2211
        %v2332 = vmul.f32 %v1759, %v2212
        %v2333 = vmul.f32 %v1759, %v2213
        %2338 = vrot.lane.b32.xlu0 %v2330, 123
        %v2339 = vpop.permute.xlu0 %2338
        %2340 = vrot.lane.b32.xlu0 %v2331, 123
        %v2341 = vpop.permute.xlu0 %2340
        %2342 = vrot.lane.b32.xlu0 %v2332, 123
        %v2343 = vpop.permute.xlu0 %2342
        %2344 = vrot.lane.b32.xlu0 %v2333, 123
        %v2345 = vpop.permute.xlu0 %2344
        %v2346 = vsel %vm1417, %v2339, %v2341
        %v2347 = vsel %vm1417, %v2341, %v2343
        %v2348 = vsel %vm1417, %v2343, %v2345
        %v2353 = vadd.f32 %v2326, %v2346
        %v2354 = vadd.f32 %v2327, %v2347
        %v2355 = vadd.f32 %v2328, %v2348
        %v2356 = vadd.f32 %v2329, %v2345
        %v2357 = vmul.f32 %v1795, %v2210
        %v2358 = vmul.f32 %v1795, %v2211
        %v2359 = vmul.f32 %v1795, %v2212
        %v2360 = vmul.f32 %v1795, %v2213
        %2365 = vrot.lane.b32.xlu0 %v2357, 122
        %v2366 = vpop.permute.xlu0 %2365
        %2367 = vrot.lane.b32.xlu0 %v2358, 122
        %v2368 = vpop.permute.xlu0 %2367
        %2369 = vrot.lane.b32.xlu0 %v2359, 122
        %v2370 = vpop.permute.xlu0 %2369
        %2371 = vrot.lane.b32.xlu0 %v2360, 122
        %v2372 = vpop.permute.xlu0 %2371
        %v2373 = vsel %vm1456, %v2366, %v2368
        %v2374 = vsel %vm1456, %v2368, %v2370
        %v2375 = vsel %vm1456, %v2370, %v2372
        %v2380 = vadd.f32 %v2353, %v2373
        %v2381 = vadd.f32 %v2354, %v2374
        %v2382 = vadd.f32 %v2355, %v2375
        %v2383 = vadd.f32 %v2356, %v2372
        %v2384 = vmul.f32 %v1831, %v2210
        %v2385 = vmul.f32 %v1831, %v2211
        %v2386 = vmul.f32 %v1831, %v2212
        %v2387 = vmul.f32 %v1831, %v2213
        %2392 = vrot.lane.b32.xlu0 %v2384, 121
        %v2393 = vpop.permute.xlu0 %2392
        %2394 = vrot.lane.b32.xlu0 %v2385, 121
        %v2395 = vpop.permute.xlu0 %2394
        %2396 = vrot.lane.b32.xlu0 %v2386, 121
        %v2397 = vpop.permute.xlu0 %2396
        %2398 = vrot.lane.b32.xlu0 %v2387, 121
        %v2399 = vpop.permute.xlu0 %2398
        %v2400 = vsel %vm1495, %v2393, %v2395
        %v2401 = vsel %vm1495, %v2395, %v2397
        %v2402 = vsel %vm1495, %v2397, %v2399
        %v2407 = vadd.f32 %v2380, %v2400
        %v2408 = vadd.f32 %v2381, %v2401
        %v2409 = vadd.f32 %v2382, %v2402
        %v2410 = vadd.f32 %v2383, %v2399
        %v2411 = vmul.f32 %v1867, %v2210
        %v2412 = vmul.f32 %v1867, %v2211
        %v2413 = vmul.f32 %v1867, %v2212
        %v2414 = vmul.f32 %v1867, %v2213
        %2419 = vrot.lane.b32.xlu0 %v2411, 120
        %v2420 = vpop.permute.xlu0 %2419
        %2421 = vrot.lane.b32.xlu0 %v2412, 120
        %v2422 = vpop.permute.xlu0 %2421
        %2423 = vrot.lane.b32.xlu0 %v2413, 120
        %v2424 = vpop.permute.xlu0 %2423
        %2425 = vrot.lane.b32.xlu0 %v2414, 120
        %v2426 = vpop.permute.xlu0 %2425
        %v2427 = vsel %vm1220, %v2420, %v2422
        %v2428 = vsel %vm1220, %v2422, %v2424
        %v2429 = vsel %vm1220, %v2424, %v2426
        %v2434 = vadd.f32 %v2407, %v2427
        %v2435 = vadd.f32 %v2408, %v2428
        %v2436 = vadd.f32 %v2409, %v2429
        %v2437 = vadd.f32 %v2410, %v2426
        %v2438 = vmul.f32 %v1903, %v2210
        %v2439 = vmul.f32 %v1903, %v2211
        %v2440 = vmul.f32 %v1903, %v2212
        %v2441 = vmul.f32 %v1903, %v2213
        %2446 = vrot.lane.b32.xlu0 %v2438, 119
        %v2447 = vpop.permute.xlu0 %2446
        %2448 = vrot.lane.b32.xlu0 %v2439, 119
        %v2449 = vpop.permute.xlu0 %2448
        %2450 = vrot.lane.b32.xlu0 %v2440, 119
        %v2451 = vpop.permute.xlu0 %2450
        %2452 = vrot.lane.b32.xlu0 %v2441, 119
        %v2453 = vpop.permute.xlu0 %2452
        %v2454 = vsel %vm1572, %v2447, %v2449
        %v2455 = vsel %vm1572, %v2449, %v2451
        %v2456 = vsel %vm1572, %v2451, %v2453
        %v2461 = vadd.f32 %v2434, %v2454
        %v2462 = vadd.f32 %v2435, %v2455
        %v2463 = vadd.f32 %v2436, %v2456
        %v2464 = vadd.f32 %v2437, %v2453
        %v2465 = vadd.f32 %v2461, %v1939
        %v2466 = vadd.f32 %v2462, %v1939
        %v2467 = vadd.f32 %v2463, %v1939
        %v2468 = vadd.f32 %v2464, %v1939
        %v2469 = vmax.f32 %v2465, 0.0
        %v2470 = vmax.f32 %v2466, 0.0
        %v2471 = vmax.f32 %v2467, 0.0
        %v2472 = vmax.f32 %v2468, 0.0
        %v2473 = vadd.f32 %v2469, %v2470
        %v2474 = vadd.f32 %v2473, %v2471
        %vm2475 = vcmask 900096
        %v2476 = vsel %vm2475, %v2472, 0.0
        %v2477 = vadd.f32 %v2474, %v2476
        %2478 = vadd.xlane.f32.xlu0 %v2477
        %v2479 = vpop.xlane.xlu0 %2478
        %v2480 = vadd.f32 %v1954, %v2479
        %v2481 = vmul.f32 %v2480, 0.0009940357
        %s2482 = sld [smem:[#allocation2]]
        %v2483 = vstv %s2482
        %v2484 = vmul.f32 %v2483, %v614
        %s2485 = sld [smem:[#allocation2 + $0x1]]
        %v2486 = vstv %s2485
        %v2487 = vmul.f32 %v2486, %v1226
        %v2488 = vadd.f32 %v2484, %v2487
        %s2489 = sld [smem:[#allocation2 + $0x2]]
        %v2490 = vstv %s2489
        %v2491 = vmul.f32 %v2490, %v2481
        %v2492 = vadd.f32 %v2488, %v2491
        %s2493 = sld [smem:[#allocation2 + $0x3]]
        %v2494 = vstv %s2493
        %v2495 = vadd.f32 %v2492, %v2494
        %vm2496 = vcmask 7168
        %2497 = vst.msk [vmem:[%s244] sm:$0xff] %vm2496, %v2495
        %p2498 = scmp.lt.s32.totalorder %s24, 1
        %s2499 = scalar_select %p2498, %s24, 1
        %p2500 = scmp.lt.s32.totalorder %s23, 0
        %s2501 = scalar_select %p2500, %s23, 0
        %s2502 = sadd.s32 %s2501, %s2499
        %s2503 = smul.addr %s2502, 8
        %s2504 = scalar_lea.vmem %s3, %s2503
        // Predicated region
        $region45: #{tpu_custom_call.1} parent=31 // pred_check
          %p2505 = pneg %p126
        $region46: #{tpu_custom_call.1} parent=31 // pred_check_branch
          %2507 = sbr.rel (%p2505) target = $region48
        $region47: #{tpu_custom_call.1} parent=31 // pred_region
          _
        $region48: #{tpu_custom_call.1} parent=31 // pred_fallthru
          _
      $region32: #{tpu_custom_call.1} parent=5 // pred_fallthru
        _
      %p2508 = scmp.le.s32.totalorder 2, %s14
      // Predicated region
      $region49: #{tpu_custom_call.1} parent=5 // pred_check
        %p2509 = pneg %p2508
      $region50: #{tpu_custom_call.1} parent=5 // pred_check_branch
        %2511 = sbr.rel (%p2509) target = $region52
      $region51: #{tpu_custom_call.1} parent=5 // pred_region
        %s2512 = ssub.s32 %s14, 2
        // Predicated region
        $region53: #{tpu_custom_call.1} parent=51 // pred_check
          %p2513 = pneg %p132
        $region54: #{tpu_custom_call.1} parent=51 // pred_check_branch
          %2515 = sbr.rel (%p2513) target = $region56
        $region55: #{tpu_custom_call.1} parent=51 // pred_region
          %p2516 = scmp.lt.s32.totalorder %s26, 1
          %s2517 = scalar_select %p2516, %s26, 1
          %p2518 = scmp.lt.s32.totalorder %s25, 0
          %s2519 = scalar_select %p2518, %s25, 0
          %s2520 = sadd.s32 %s2519, %s2517
          %s2521 = smul.addr %s2520, 8
          %s2522 = scalar_lea.vmem %s3, %s2521
        $region56: #{tpu_custom_call.1} parent=51 // pred_fallthru
          _
      $region52: #{tpu_custom_call.1} parent=5 // pred_fallthru
        _
    $region6: #{tpu_custom_call.1} parent=1 // loop_footer
      %s18 = sadd.s32 1, %s14
    $region7: #{tpu_custom_call.1} parent=1 // loop_footer_branch
      %13 = sbr.rel target = $region3
    $region8: #{tpu_custom_call.1} parent=1 // loop_exit
      _
    %2523 = vsyncpa [#allocation3], 1
    %s2524 = scalar_lea.sflag [#allocation3], 1
    %2525 = vsyncpa %s2524, 1
    %2526 = vsyncpa [#allocation7], 1
    %2527 = vsyncpa [#allocation4], 1
    %s2528 = scalar_lea.sflag [#allocation4], 1
    %2529 = vsyncpa %s2528, 1

</llo_original>
